<compile_context>
chip_gen: v6e
topology: v6e:2x2x1
jax: 0.10.0
libtpu: 0.0.40
codegen_flags: <defaults>
</compile_context>

<pallas_src>
import jax
import jax.numpy as jnp
from jax import lax
from jax.experimental import pallas as pl
from jax.experimental.pallas import tpu as pltpu

BN_EPS = 1e-5


def _hswish(v):
    # h_swish(x) = x * relu6(x + 3) / 6
    return v * jnp.clip(v + 3.0, 0.0, 6.0) * (1.0 / 6.0)


def _round_up(a, m):
    return -(-a // m) * m


def _vmem_capacity_bytes():
    try:
        return int(pltpu.get_tpu_info().vmem_capacity_bytes)
    except Exception:
        return 64 * 1024 * 1024  # conservative (v7x); v5e/v6e have 128 MiB


def coord_attn_kernel(x_ref, p01_ref, pscale_ref, rh_ref, rw_ref,
                      w1_ref, b1_ref, wh_ref, bh_ref, ww_ref, bw_ref,
                      out_ref):
    """One grid step processes a lane-dense (bt*C, L) slab, L = H*W (bt images in the M dim)."""
    h = rh_ref.shape[0]
    w = rw_ref.shape[0]
    hp = p01_ref.shape[1] - w            # lane-aligned (multiple of 128) start of the W segment

    xb = x_ref[0]                                                         # (btC, L) slab dtype

    # --- pooling (sums over W per row / over H per col) as ONE lane-dense MXU matmul ---
    pooled = jnp.dot(xb, p01_ref[...], preferred_element_type=jnp.float32)  # (btC, hp+w)

    # --- conv1 (BN folded, block-diagonal over batch tile) + mean scaling + h_swish ---
    y = jnp.dot(w1_ref[...], pooled, preferred_element_type=jnp.float32)    # (bt*mip, hp+w)
    y = _hswish(y * pscale_ref[...] + b1_ref[...])

    # --- conv_h / conv_w + sigmoid gates (tiny block-diag matmuls, tile-aligned slices) ---
    a_h = jax.nn.sigmoid(jnp.dot(wh_ref[...], y[:, :h],
                                 preferred_element_type=jnp.float32) + bh_ref[...])   # (btC, h)
    a_w = jax.nn.sigmoid(jnp.dot(ww_ref[...], y[:, hp:hp + w],
                                 preferred_element_type=jnp.float32) + bw_ref[...])   # (btC, w)

    # --- broadcast gates to (btC, L) via 0/1 matmuls (bf16 operands on bf16 slabs) ---
    bdt = rh_ref.dtype
    gate = (jnp.dot(a_h.astype(bdt), rh_ref[...], preferred_element_type=jnp.float32) *
            jnp.dot(a_w.astype(bdt), rw_ref[...], preferred_element_type=jnp.float32))  # f32

    # Final multiply in the slab's native dtype (bf16 VALU on v6e/v7x; on v5e an f32
    # multiply + single cast at the store would avoid bf16 pack/unpack — not specialized here).
    out_ref[0] = (xb * gate.astype(xb.dtype)).astype(out_ref.dtype)


def coordinate_attention(x, params):
    """x: (N, C, H, W). params: raw conv / eval-mode BN parameters (see make_params)."""
    n, c, h, w = x.shape
    L = h * w
    mip = params["w1"].shape[0]
    oup = params["wh"].shape[0]
    assert oup == c, "inp must equal oup for the final broadcast multiply"

    f32 = jnp.float32
    xdt = x.dtype
    itemsize = jnp.dtype(xdt).itemsize

    # ---- fold eval-mode BatchNorm into conv1 (wrapper-side, one-time) ----
    # TODO(synk): training-mode BatchNorm (batch statistics) is not implemented; eval-mode
    # running stats are folded into conv1.
    bn_scale = params["gamma"] * lax.rsqrt(params["rv"] + BN_EPS)        # (mip, 1)
    bn_shift = params["beta"] - params["rm"] * bn_scale                  # (mip, 1)
    w1f = (params["w1"] * bn_scale).astype(f32)                          # (mip, C)
    b1f = (params["b1"] * bn_scale + bn_shift).astype(f32)               # (mip, 1)

    # ---- constant pooling / broadcast matrices; H|W split padded to a 128-lane boundary ----
    hp = _round_up(h, 128)
    ncols = hp + w
    bdt = xdt if itemsize < 4 else f32          # 0/1 masks & gates exact/safe in bf16
    lane = jnp.arange(L, dtype=jnp.int32)
    rh_f = (lane[None, :] // w == jnp.arange(h, dtype=jnp.int32)[:, None]).astype(f32)  # (h, L)
    rw_f = (lane[None, :] % w == jnp.arange(w, dtype=jnp.int32)[:, None]).astype(f32)   # (w, L)
    rh, rw = rh_f.astype(bdt), rw_f.astype(bdt)
    p01 = (jnp.zeros((L, ncols), f32).at[:, :h].set(rh_f.T)
           .at[:, hp:].set(rw_f.T)).astype(xdt)                                          # (L, ncols)
    pscale = (jnp.zeros((1, ncols), f32).at[0, :h].set(1.0 / w).at[0, hp:].set(1.0 / h))

    # ---- batch-tile selection (HBM-bandwidth bound -> biggest block that fits) ----
    vmem_cap = _vmem_capacity_bytes()                       # 128 MiB v5e/v6e, 64 MiB v7x
    vmem_budget = int(vmem_cap * 0.7)
    target_block = (4 << 20) if vmem_cap <= (64 << 20) else (8 << 20)
    per_image = c * L * itemsize
    bdt_size = jnp.dtype(bdt).itemsize
    const_bytes = L * ncols * itemsize + (h + w) * L * bdt_size + ncols * 4

    def vmem_est(bt):
        btc = bt * c
        block = btc * L * itemsize
        weights = 3 * (bt * mip) * btc * 4 + bt * (mip + 2 * c) * 4
        interm = 3 * btc * L * 4                             # f32 gate / dot intermediates
        return 4 * block + 2 * (const_bytes + weights) + interm

    bt_cap = n if n < 2 else max(1, n // 2)                  # keep >= 2 grid steps (v7x megacore)
    bt = max(1, min(bt_cap, target_block // max(per_image, 1)))
    while bt > 1 and vmem_est(bt) > vmem_budget:
        bt = max(1, (bt * 3) // 4)

    nb = -(-n // bt)                                         # ragged N handled by padding
    n_pad = nb * bt
    x_flat = x.reshape(n, c, L)
    if n_pad != n:
        x_flat = jnp.concatenate([x_flat, jnp.zeros((n_pad - n, c, L), xdt)], axis=0)
    x_blk = x_flat.reshape(nb, bt * c, L)
    btc = bt * c

    # ---- block-diagonal (batch-tiled) 1x1-conv weights: folds bt into the MXU M dim ----
    eye_bt = jnp.eye(bt, dtype=f32)
    w1_blk = jnp.kron(eye_bt, w1f)                           # (bt*mip, bt*C)
    wh_blk = jnp.kron(eye_bt, params["wh"].astype(f32))      # (bt*C, bt*mip)
    ww_blk = jnp.kron(eye_bt, params["ww"].astype(f32))
    b1_blk = jnp.tile(b1f, (bt, 1))
    bh_blk = jnp.tile(params["bh"].astype(f32), (bt, 1))
    bw_blk = jnp.tile(params["bw"].astype(f32), (bt, 1))

    weight_bytes = 4 * (w1_blk.size + wh_blk.size + ww_blk.size +
                        b1_blk.size + bh_blk.size + bw_blk.size)
    flops_per_step = (2 * btc * L * ncols                    # pooling matmul
                      + 2 * (bt * mip) * btc * ncols         # conv1 (block-diag)
                      + 4 * btc * (bt * mip) * ncols         # conv_h / conv_w
                      + 2 * btc * (h + w) * L                # gate broadcast matmuls
                      + 2 * btc * L)                         # gate combine + final multiply
    cost = pl.CostEstimate(
        flops=int(nb * flops_per_step),
        transcendentals=int(nb * btc * (h + w)),
        bytes_accessed=int(2 * n_pad * c * L * itemsize + const_bytes + weight_bytes),
    )

    vmem_limit = int(min(int(vmem_cap * 0.9), max(32 << 20, vmem_est(bt) + (8 << 20))))

    def build(single_buffer_consts):
        if single_buffer_consts:
            def const(shape):
                return pl.BlockSpec(shape, lambda *_: (0,) * len(shape),
                                    pipeline_mode=pl.Buffered(1))
        else:
            def const(shape):
                return pl.BlockSpec(shape, lambda *_: (0,) * len(shape))
        return pl.pallas_call(
            coord_attn_kernel,
            out_shape=jax.ShapeDtypeStruct((nb, btc, L), xdt),
            grid_spec=pltpu.PrefetchScalarGridSpec(
                num_scalar_prefetch=0,
                grid=(nb,),
                in_specs=[
                    pl.BlockSpec((1, btc, L), lambda i: (i, 0, 0)),   # x (lane-dense slab)
                    const((L, ncols)),          # p01 pooling matrix
                    const((1, ncols)),          # pscale (1/W | 1/H, with pad zeros)
                    const((h, L)),              # rh row-broadcast matrix
                    const((w, L)),              # rw col-broadcast matrix
                    const((bt * mip, btc)),     # w1 (BN folded, block-diag)
                    const((bt * mip, 1)),       # b1
                    const((btc, bt * mip)),     # wh
                    const((btc, 1)),            # bh
                    const((btc, bt * mip)),     # ww
                    const((btc, 1)),            # bw
                ],
                out_specs=pl.BlockSpec((1, btc, L), lambda i: (i, 0, 0)),
            ),
            compiler_params=pltpu.CompilerParams(
                dimension_semantics=("parallel",),
                vmem_limit_bytes=vmem_limit,
            ),
            cost_estimate=cost,
        )

    args = (x_blk, p01, pscale, rh, rw, w1_blk, b1_blk, wh_blk, bh_blk, ww_blk, bw_blk)
    try:
        out_blk = build(True)(*args)      # constants single-buffered (VMEM saving, esp. v7x)
    except Exception:
        out_blk = build(False)(*args)     # fallback if Buffered(1) is rejected by this jax build

    return out_blk.reshape(n_pad, c, L)[:n].reshape(n, c, h, w)


def reference_jax(x, params):
    """Pure-JAX reference (mirrors the PyTorch forward, eval-mode BN)."""
    x = x.astype(jnp.float32)
    x_h = jnp.mean(x, axis=3)                                   # (N, C, H)
    x_w = jnp.mean(x, axis=2)                                   # (N, C, W)
    y = jnp.concatenate([x_h, x_w], axis=2)                     # (N, C, H+W)
    y = jnp.einsum("mc,ncl->nml", params["w1"], y) + params["b1"][None, :, :]
    scale = params["gamma"] * jax.lax.rsqrt(params["rv"] + BN_EPS)
    shift = params["beta"] - params["rm"] * scale
    y = y * scale[None] + shift[None]
    y = _hswish(y)
    h = x.shape[2]
    yh, yw = y[:, :, :h], y[:, :, h:]
    a_h = jax.nn.sigmoid(jnp.einsum("om,nml->nol", params["wh"], yh) + params["bh"][None])
    a_w = jax.nn.sigmoid(jnp.einsum("om,nml->nol", params["ww"], yw) + params["bw"][None])
    return x * a_h[:, :, :, None] * a_w[:, :, None, :]


def make_params(key, inp, oup, reduction=32):
    mip = max(8, inp // reduction)
    ks = jax.random.split(key, 8)
    return {
        "w1":    jax.random.normal(ks[0], (mip, inp), jnp.float32) / jnp.sqrt(inp),
        "b1":    0.01 * jax.random.normal(ks[1], (mip, 1), jnp.float32),
        "gamma": 1.0 + 0.1 * jax.random.normal(ks[2], (mip, 1), jnp.float32),
        "beta":  0.05 * jax.random.normal(ks[3], (mip, 1), jnp.float32),
        "rm":    0.1 * jax.random.normal(ks[4], (mip, 1), jnp.float32),
        "rv":    1.0 + 0.1 * jnp.abs(jax.random.normal(ks[5], (mip, 1), jnp.float32)),
        "wh":    jax.random.normal(ks[6], (oup, mip), jnp.float32) / jnp.sqrt(mip),
        "bh":    jnp.zeros((oup, 1), jnp.float32),
        "ww":    jax.random.normal(ks[7], (oup, mip), jnp.float32) / jnp.sqrt(mip),
        "bw":    jnp.zeros((oup, 1), jnp.float32),
    }


if __name__ == "__main__":
    key = jax.random.PRNGKey(0)
    k_x, k_p, k_x2, k_x3 = jax.random.split(key, 4)

    # --- primary test: f32, small shapes consistent with the module (inp=oup=4, mip=8) ---
    N, C, H, W = 2, 4, 16, 16
    x = jax.random.normal(k_x, (N, C, H, W), jnp.float32)
    params = make_params(k_p, inp=C, oup=C, reduction=32)
    out = jax.block_until_ready(coordinate_attention(x, params))
    ref = jax.block_until_ready(reference_jax(x, params))
    assert out.shape == (N, C, H, W)
    assert jnp.allclose(out, ref, atol=1e-5, rtol=1e-5), "f32 mismatch vs JAX reference"

    # --- ragged batch (N=5 -> bt=2, wrapper pads to 6) + small L (masked-lane path) ---
    N2, C2, H2, W2 = 5, 8, 8, 8
    x2 = jax.random.normal(k_x2, (N2, C2, H2, W2), jnp.float32)
    params2 = make_params(jax.random.PRNGKey(1), inp=C2, oup=C2, reduction=32)
    out2 = jax.block_until_ready(coordinate_attention(x2, params2))
    ref2 = reference_jax(x2, params2)
    assert jnp.allclose(out2, ref2, atol=1e-5, rtol=1e-5), "ragged/small-L mismatch"

    # --- bf16 slab path (gates / broadcast matrices in bf16) ---
    x3 = jax.random.normal(k_x3, (4, 4, 16, 16), jnp.float32).astype(jnp.bfloat16)
    out3 = jax.block_until_ready(coordinate_attention(x3, params))
    ref3 = reference_jax(x3.astype(jnp.float32), params)
    assert jnp.allclose(out3.astype(jnp.float32), ref3, atol=6e-2, rtol=5e-2), "bf16 mismatch"

    print("KERNEL_OK")
</pallas_src>

<mosaic_0001>
module attributes {stable_mosaic.version = 11 : i64} {
  func.func @coord_attn_kernel(%arg0: i32, %arg1: memref<1x4x256xf32, #tpu.memory_space<vmem>>, %arg2: memref<256x144xf32, #tpu.memory_space<vmem>>, %arg3: memref<1x144xf32, #tpu.memory_space<vmem>>, %arg4: memref<16x256xf32, #tpu.memory_space<vmem>>, %arg5: memref<16x256xf32, #tpu.memory_space<vmem>>, %arg6: memref<8x4xf32, #tpu.memory_space<vmem>>, %arg7: memref<8x1xf32, #tpu.memory_space<vmem>>, %arg8: memref<4x8xf32, #tpu.memory_space<vmem>>, %arg9: memref<4x1xf32, #tpu.memory_space<vmem>>, %arg10: memref<4x8xf32, #tpu.memory_space<vmem>>, %arg11: memref<4x1xf32, #tpu.memory_space<vmem>>, %arg12: memref<1x4x256xf32, #tpu.memory_space<vmem>>) attributes {dimension_semantics = [#tpu.dimension_semantics<parallel>], iteration_bounds = array<i64: 2>, scalar_prefetch = 0 : i64, scratch_operands = 0 : i64, tpu.core_type = #tpu.core_type<tc>, window_params = [{transform_indices = @transform_0, window_bounds = array<i64: 1, 4, 256>}, {pipeline_mode = #tpu.pipeline_mode<synchronous>, transform_indices = @transform_1, window_bounds = array<i64: 256, 144>}, {pipeline_mode = #tpu.pipeline_mode<synchronous>, transform_indices = @transform_2, window_bounds = array<i64: 1, 144>}, {pipeline_mode = #tpu.pipeline_mode<synchronous>, transform_indices = @transform_3, window_bounds = array<i64: 16, 256>}, {pipeline_mode = #tpu.pipeline_mode<synchronous>, transform_indices = @transform_4, window_bounds = array<i64: 16, 256>}, {pipeline_mode = #tpu.pipeline_mode<synchronous>, transform_indices = @transform_5, window_bounds = array<i64: 8, 4>}, {pipeline_mode = #tpu.pipeline_mode<synchronous>, transform_indices = @transform_6, window_bounds = array<i64: 8, 1>}, {pipeline_mode = #tpu.pipeline_mode<synchronous>, transform_indices = @transform_7, window_bounds = array<i64: 4, 8>}, {pipeline_mode = #tpu.pipeline_mode<synchronous>, transform_indices = @transform_8, window_bounds = array<i64: 4, 1>}, {pipeline_mode = #tpu.pipeline_mode<synchronous>, transform_indices = @transform_9, window_bounds = array<i64: 4, 8>}, {pipeline_mode = #tpu.pipeline_mode<synchronous>, transform_indices = @transform_10, window_bounds = array<i64: 4, 1>}, {transform_indices = @transform_11, window_bounds = array<i64: 1, 4, 256>}]} {
    %c0 = arith.constant 0 : index
    %c0_0 = arith.constant 0 : index
    %c0_1 = arith.constant 0 : index
    %0 = vector.load %arg1[%c0, %c0_0, %c0_1] : memref<1x4x256xf32, #tpu.memory_space<vmem>>, vector<1x4x256xf32>
    %1 = vector.shape_cast %0 : vector<1x4x256xf32> to vector<4x256xf32>
    %c0_2 = arith.constant 0 : index
    %c0_3 = arith.constant 0 : index
    %2 = vector.load %arg2[%c0_2, %c0_3] : memref<256x144xf32, #tpu.memory_space<vmem>>, vector<256x144xf32>
    %cst = arith.constant dense<0.000000e+00> : vector<4x144xf32>
    %3 = tpu.matmul %1, %2, %cst {dimension_numbers = #tpu.dot_dimension_numbers<[1], [0], [0], [1], [0, 0, 1, 1], [], []>} : vector<4x256xf32>, vector<256x144xf32>, vector<4x144xf32> -> vector<4x144xf32>
    %c0_4 = arith.constant 0 : index
    %c0_5 = arith.constant 0 : index
    %4 = vector.load %arg6[%c0_4, %c0_5] : memref<8x4xf32, #tpu.memory_space<vmem>>, vector<8x4xf32>
    %cst_6 = arith.constant dense<0.000000e+00> : vector<8x144xf32>
    %5 = tpu.matmul %4, %3, %cst_6 {dimension_numbers = #tpu.dot_dimension_numbers<[1], [0], [0], [1], [0, 0, 1, 1], [], []>} : vector<8x4xf32>, vector<4x144xf32>, vector<8x144xf32> -> vector<8x144xf32>
    %c0_7 = arith.constant 0 : index
    %c0_8 = arith.constant 0 : index
    %6 = vector.load %arg3[%c0_7, %c0_8] : memref<1x144xf32, #tpu.memory_space<vmem>>, vector<1x144xf32>
    %7 = vector.broadcast %6 : vector<1x144xf32> to vector<8x144xf32>
    %8 = arith.mulf %5, %7 : vector<8x144xf32>
    %c0_9 = arith.constant 0 : index
    %c0_10 = arith.constant 0 : index
    %9 = vector.load %arg7[%c0_9, %c0_10] : memref<8x1xf32, #tpu.memory_space<vmem>>, vector<8x1xf32>
    %10 = vector.broadcast %9 : vector<8x1xf32> to vector<8x144xf32>
    %11 = arith.addf %8, %10 : vector<8x144xf32>
    %cst_11 = arith.constant 3.000000e+00 : f32
    %12 = vector.broadcast %cst_11 : f32 to vector<8x144xf32>
    %13 = arith.addf %11, %12 : vector<8x144xf32>
    %cst_12 = arith.constant 0.000000e+00 : f32
    %cst_13 = arith.constant 6.000000e+00 : f32
    %14 = vector.broadcast %cst_12 : f32 to vector<8x144xf32>
    %15 = arith.maximumf %14, %13 : vector<8x144xf32>
    %16 = vector.broadcast %cst_13 : f32 to vector<8x144xf32>
    %17 = arith.minimumf %16, %15 : vector<8x144xf32>
    %18 = arith.mulf %11, %17 : vector<8x144xf32>
    %cst_14 = arith.constant 0.166666672 : f32
    %19 = vector.broadcast %cst_14 : f32 to vector<8x144xf32>
    %20 = arith.mulf %18, %19 : vector<8x144xf32>
    %c0_15 = arith.constant 0 : index
    %c0_16 = arith.constant 0 : index
    %21 = vector.load %arg8[%c0_15, %c0_16] : memref<4x8xf32, #tpu.memory_space<vmem>>, vector<4x8xf32>
    %22 = vector.extract_strided_slice %20 {offsets = [0, 0], sizes = [8, 16], strides = [1, 1]} : vector<8x144xf32> to vector<8x16xf32>
    %cst_17 = arith.constant dense<0.000000e+00> : vector<4x16xf32>
    %23 = tpu.matmul %21, %22, %cst_17 {dimension_numbers = #tpu.dot_dimension_numbers<[1], [0], [0], [1], [0, 0, 1, 1], [], []>} : vector<4x8xf32>, vector<8x16xf32>, vector<4x16xf32> -> vector<4x16xf32>
    %c0_18 = arith.constant 0 : index
    %c0_19 = arith.constant 0 : index
    %24 = vector.load %arg9[%c0_18, %c0_19] : memref<4x1xf32, #tpu.memory_space<vmem>>, vector<4x1xf32>
    %25 = vector.broadcast %24 : vector<4x1xf32> to vector<4x16xf32>
    %26 = arith.addf %23, %25 : vector<4x16xf32>
    %27 = arith.negf %26 : vector<4x16xf32>
    %28 = math.exp %27 : vector<4x16xf32>
    %cst_20 = arith.constant 1.000000e+00 : f32
    %29 = vector.broadcast %cst_20 : f32 to vector<4x16xf32>
    %30 = arith.addf %29, %28 : vector<4x16xf32>
    %31 = arith.divf %29, %30 : vector<4x16xf32>
    %c0_21 = arith.constant 0 : index
    %c0_22 = arith.constant 0 : index
    %32 = vector.load %arg10[%c0_21, %c0_22] : memref<4x8xf32, #tpu.memory_space<vmem>>, vector<4x8xf32>
    %33 = vector.extract_strided_slice %20 {offsets = [0, 128], sizes = [8, 16], strides = [1, 1]} : vector<8x144xf32> to vector<8x16xf32>
    %cst_23 = arith.constant dense<0.000000e+00> : vector<4x16xf32>
    %34 = tpu.matmul %32, %33, %cst_23 {dimension_numbers = #tpu.dot_dimension_numbers<[1], [0], [0], [1], [0, 0, 1, 1], [], []>} : vector<4x8xf32>, vector<8x16xf32>, vector<4x16xf32> -> vector<4x16xf32>
    %c0_24 = arith.constant 0 : index
    %c0_25 = arith.constant 0 : index
    %35 = vector.load %arg11[%c0_24, %c0_25] : memref<4x1xf32, #tpu.memory_space<vmem>>, vector<4x1xf32>
    %36 = vector.broadcast %35 : vector<4x1xf32> to vector<4x16xf32>
    %37 = arith.addf %34, %36 : vector<4x16xf32>
    %38 = arith.negf %37 : vector<4x16xf32>
    %39 = math.exp %38 : vector<4x16xf32>
    %cst_26 = arith.constant 1.000000e+00 : f32
    %40 = vector.broadcast %cst_26 : f32 to vector<4x16xf32>
    %41 = arith.addf %40, %39 : vector<4x16xf32>
    %42 = arith.divf %40, %41 : vector<4x16xf32>
    %c0_27 = arith.constant 0 : index
    %c0_28 = arith.constant 0 : index
    %43 = vector.load %arg4[%c0_27, %c0_28] : memref<16x256xf32, #tpu.memory_space<vmem>>, vector<16x256xf32>
    %cst_29 = arith.constant dense<0.000000e+00> : vector<4x256xf32>
    %44 = tpu.matmul %31, %43, %cst_29 {dimension_numbers = #tpu.dot_dimension_numbers<[1], [0], [0], [1], [0, 0, 1, 1], [], []>} : vector<4x16xf32>, vector<16x256xf32>, vector<4x256xf32> -> vector<4x256xf32>
    %c0_30 = arith.constant 0 : index
    %c0_31 = arith.constant 0 : index
    %45 = vector.load %arg5[%c0_30, %c0_31] : memref<16x256xf32, #tpu.memory_space<vmem>>, vector<16x256xf32>
    %cst_32 = arith.constant dense<0.000000e+00> : vector<4x256xf32>
    %46 = tpu.matmul %42, %45, %cst_32 {dimension_numbers = #tpu.dot_dimension_numbers<[1], [0], [0], [1], [0, 0, 1, 1], [], []>} : vector<4x16xf32>, vector<16x256xf32>, vector<4x256xf32> -> vector<4x256xf32>
    %47 = arith.mulf %44, %46 : vector<4x256xf32>
    %48 = arith.mulf %1, %47 : vector<4x256xf32>
    %c0_33 = arith.constant 0 : index
    %c0_34 = arith.constant 0 : index
    %c0_35 = arith.constant 0 : index
    %49 = vector.load %arg12[%c0_33, %c0_34, %c0_35] : memref<1x4x256xf32, #tpu.memory_space<vmem>>, vector<1x4x256xf32>
    %50 = vector.shape_cast %49 : vector<1x4x256xf32> to vector<4x256xf32>
    %51 = vector.shape_cast %48 : vector<4x256xf32> to vector<1x4x256xf32>
    tpu.vector_store %arg12[%c0_33, %c0_34, %c0_35], %51 {strides = array<i32>} : memref<1x4x256xf32, #tpu.memory_space<vmem>>, vector<1x4x256xf32>,
    return
  }
  func.func @transform_0(%arg0: i32) -> (i32, i32, i32) {
    %c0_i32 = arith.constant 0 : i32
    %c0_i32_0 = arith.constant 0 : i32
    %c0_i32_1 = arith.constant 0 : i32
    return %arg0, %c0_i32, %c0_i32_0 : i32, i32, i32
  }
  func.func @transform_1(%arg0: i32) -> (i32, i32) {
    %c0_i32 = arith.constant 0 : i32
    %c0_i32_0 = arith.constant 0 : i32
    %c0_i32_1 = arith.constant 0 : i32
    return %c0_i32, %c0_i32_0 : i32, i32
  }
  func.func @transform_2(%arg0: i32) -> (i32, i32) {
    %c0_i32 = arith.constant 0 : i32
    %c0_i32_0 = arith.constant 0 : i32
    %c0_i32_1 = arith.constant 0 : i32
    return %c0_i32, %c0_i32_0 : i32, i32
  }
  func.func @transform_3(%arg0: i32) -> (i32, i32) {
    %c0_i32 = arith.constant 0 : i32
    %c0_i32_0 = arith.constant 0 : i32
    %c0_i32_1 = arith.constant 0 : i32
    return %c0_i32, %c0_i32_0 : i32, i32
  }
  func.func @transform_4(%arg0: i32) -> (i32, i32) {
    %c0_i32 = arith.constant 0 : i32
    %c0_i32_0 = arith.constant 0 : i32
    %c0_i32_1 = arith.constant 0 : i32
    return %c0_i32, %c0_i32_0 : i32, i32
  }
  func.func @transform_5(%arg0: i32) -> (i32, i32) {
    %c0_i32 = arith.constant 0 : i32
    %c0_i32_0 = arith.constant 0 : i32
    %c0_i32_1 = arith.constant 0 : i32
    return %c0_i32, %c0_i32_0 : i32, i32
  }
  func.func @transform_6(%arg0: i32) -> (i32, i32) {
    %c0_i32 = arith.constant 0 : i32
    %c0_i32_0 = arith.constant 0 : i32
    %c0_i32_1 = arith.constant 0 : i32
    return %c0_i32, %c0_i32_0 : i32, i32
  }
  func.func @transform_7(%arg0: i32) -> (i32, i32) {
    %c0_i32 = arith.constant 0 : i32
    %c0_i32_0 = arith.constant 0 : i32
    %c0_i32_1 = arith.constant 0 : i32
    return %c0_i32, %c0_i32_0 : i32, i32
  }
  func.func @transform_8(%arg0: i32) -> (i32, i32) {
    %c0_i32 = arith.constant 0 : i32
    %c0_i32_0 = arith.constant 0 : i32
    %c0_i32_1 = arith.constant 0 : i32
    return %c0_i32, %c0_i32_0 : i32, i32
  }
  func.func @transform_9(%arg0: i32) -> (i32, i32) {
    %c0_i32 = arith.constant 0 : i32
    %c0_i32_0 = arith.constant 0 : i32
    %c0_i32_1 = arith.constant 0 : i32
    return %c0_i32, %c0_i32_0 : i32, i32
  }
  func.func @transform_10(%arg0: i32) -> (i32, i32) {
    %c0_i32 = arith.constant 0 : i32
    %c0_i32_0 = arith.constant 0 : i32
    %c0_i32_1 = arith.constant 0 : i32
    return %c0_i32, %c0_i32_0 : i32, i32
  }
  func.func @transform_11(%arg0: i32) -> (i32, i32, i32) {
    %c0_i32 = arith.constant 0 : i32
    %c0_i32_0 = arith.constant 0 : i32
    %c0_i32_1 = arith.constant 0 : i32
    return %arg0, %c0_i32, %c0_i32_0 : i32, i32, i32
  }
}

module attributes {stable_mosaic.version = 11 : i64} {
  func.func @coord_attn_kernel(%arg0: i32, %arg1: memref<1x4x256xf32, #tpu.memory_space<vmem>>, %arg2: memref<256x144xf32, #tpu.memory_space<vmem>>, %arg3: memref<1x144xf32, #tpu.memory_space<vmem>>, %arg4: memref<16x256xf32, #tpu.memory_space<vmem>>, %arg5: memref<16x256xf32, #tpu.memory_space<vmem>>, %arg6: memref<8x4xf32, #tpu.memory_space<vmem>>, %arg7: memref<8x1xf32, #tpu.memory_space<vmem>>, %arg8: memref<4x8xf32, #tpu.memory_space<vmem>>, %arg9: memref<4x1xf32, #tpu.memory_space<vmem>>, %arg10: memref<4x8xf32, #tpu.memory_space<vmem>>, %arg11: memref<4x1xf32, #tpu.memory_space<vmem>>, %arg12: memref<1x4x256xf32, #tpu.memory_space<vmem>>) attributes {dimension_semantics = [#tpu.dimension_semantics<parallel>], iteration_bounds = array<i64: 2>, scalar_prefetch = 0 : i64, scratch_operands = 0 : i64, tpu.core_type = #tpu.core_type<tc>, window_params = [{transform_indices = @transform_0, window_bounds = array<i64: 1, 4, 256>}, {pipeline_mode = #tpu.pipeline_mode<synchronous>, transform_indices = @transform_1, window_bounds = array<i64: 256, 144>}, {pipeline_mode = #tpu.pipeline_mode<synchronous>, transform_indices = @transform_2, window_bounds = array<i64: 1, 144>}, {pipeline_mode = #tpu.pipeline_mode<synchronous>, transform_indices = @transform_3, window_bounds = array<i64: 16, 256>}, {pipeline_mode = #tpu.pipeline_mode<synchronous>, transform_indices = @transform_4, window_bounds = array<i64: 16, 256>}, {pipeline_mode = #tpu.pipeline_mode<synchronous>, transform_indices = @transform_5, window_bounds = array<i64: 8, 4>}, {pipeline_mode = #tpu.pipeline_mode<synchronous>, transform_indices = @transform_6, window_bounds = array<i64: 8, 1>}, {pipeline_mode = #tpu.pipeline_mode<synchronous>, transform_indices = @transform_7, window_bounds = array<i64: 4, 8>}, {pipeline_mode = #tpu.pipeline_mode<synchronous>, transform_indices = @transform_8, window_bounds = array<i64: 4, 1>}, {pipeline_mode = #tpu.pipeline_mode<synchronous>, transform_indices = @transform_9, window_bounds = array<i64: 4, 8>}, {pipeline_mode = #tpu.pipeline_mode<synchronous>, transform_indices = @transform_10, window_bounds = array<i64: 4, 1>}, {transform_indices = @transform_11, window_bounds = array<i64: 1, 4, 256>}]} {
    %c0 = arith.constant 0 : index
    %c0_0 = arith.constant 0 : index
    %c0_1 = arith.constant 0 : index
    %0 = vector.load %arg1[%c0, %c0_0, %c0_1] : memref<1x4x256xf32, #tpu.memory_space<vmem>>, vector<1x4x256xf32>
    %1 = vector.shape_cast %0 : vector<1x4x256xf32> to vector<4x256xf32>
    %c0_2 = arith.constant 0 : index
    %c0_3 = arith.constant 0 : index
    %2 = vector.load %arg2[%c0_2, %c0_3] : memref<256x144xf32, #tpu.memory_space<vmem>>, vector<256x144xf32>
    %cst = arith.constant dense<0.000000e+00> : vector<4x144xf32>
    %3 = tpu.matmul %1, %2, %cst {dimension_numbers = #tpu.dot_dimension_numbers<[1], [0], [0], [1], [0, 0, 1, 1], [], []>} : vector<4x256xf32>, vector<256x144xf32>, vector<4x144xf32> -> vector<4x144xf32>
    %c0_4 = arith.constant 0 : index
    %c0_5 = arith.constant 0 : index
    %4 = vector.load %arg6[%c0_4, %c0_5] : memref<8x4xf32, #tpu.memory_space<vmem>>, vector<8x4xf32>
    %cst_6 = arith.constant dense<0.000000e+00> : vector<8x144xf32>
    %5 = tpu.matmul %4, %3, %cst_6 {dimension_numbers = #tpu.dot_dimension_numbers<[1], [0], [0], [1], [0, 0, 1, 1], [], []>} : vector<8x4xf32>, vector<4x144xf32>, vector<8x144xf32> -> vector<8x144xf32>
    %c0_7 = arith.constant 0 : index
    %c0_8 = arith.constant 0 : index
    %6 = vector.load %arg3[%c0_7, %c0_8] : memref<1x144xf32, #tpu.memory_space<vmem>>, vector<1x144xf32>
    %7 = vector.broadcast %6 : vector<1x144xf32> to vector<8x144xf32>
    %8 = arith.mulf %5, %7 : vector<8x144xf32>
    %c0_9 = arith.constant 0 : index
    %c0_10 = arith.constant 0 : index
    %9 = vector.load %arg7[%c0_9, %c0_10] : memref<8x1xf32, #tpu.memory_space<vmem>>, vector<8x1xf32>
    %10 = vector.broadcast %9 : vector<8x1xf32> to vector<8x144xf32>
    %11 = arith.addf %8, %10 : vector<8x144xf32>
    %cst_11 = arith.constant 3.000000e+00 : f32
    %12 = vector.broadcast %cst_11 : f32 to vector<8x144xf32>
    %13 = arith.addf %11, %12 : vector<8x144xf32>
    %cst_12 = arith.constant 0.000000e+00 : f32
    %cst_13 = arith.constant 6.000000e+00 : f32
    %14 = vector.broadcast %cst_12 : f32 to vector<8x144xf32>
    %15 = arith.maximumf %14, %13 : vector<8x144xf32>
    %16 = vector.broadcast %cst_13 : f32 to vector<8x144xf32>
    %17 = arith.minimumf %16, %15 : vector<8x144xf32>
    %18 = arith.mulf %11, %17 : vector<8x144xf32>
    %cst_14 = arith.constant 0.166666672 : f32
    %19 = vector.broadcast %cst_14 : f32 to vector<8x144xf32>
    %20 = arith.mulf %18, %19 : vector<8x144xf32>
    %c0_15 = arith.constant 0 : index
    %c0_16 = arith.constant 0 : index
    %21 = vector.load %arg8[%c0_15, %c0_16] : memref<4x8xf32, #tpu.memory_space<vmem>>, vector<4x8xf32>
    %22 = vector.extract_strided_slice %20 {offsets = [0, 0], sizes = [8, 16], strides = [1, 1]} : vector<8x144xf32> to vector<8x16xf32>
    %cst_17 = arith.constant dense<0.000000e+00> : vector<4x16xf32>
    %23 = tpu.matmul %21, %22, %cst_17 {dimension_numbers = #tpu.dot_dimension_numbers<[1], [0], [0], [1], [0, 0, 1, 1], [], []>} : vector<4x8xf32>, vector<8x16xf32>, vector<4x16xf32> -> vector<4x16xf32>
    %c0_18 = arith.constant 0 : index
    %c0_19 = arith.constant 0 : index
    %24 = vector.load %arg9[%c0_18, %c0_19] : memref<4x1xf32, #tpu.memory_space<vmem>>, vector<4x1xf32>
    %25 = vector.broadcast %24 : vector<4x1xf32> to vector<4x16xf32>
    %26 = arith.addf %23, %25 : vector<4x16xf32>
    %27 = arith.negf %26 : vector<4x16xf32>
    %28 = math.exp %27 : vector<4x16xf32>
    %cst_20 = arith.constant 1.000000e+00 : f32
    %29 = vector.broadcast %cst_20 : f32 to vector<4x16xf32>
    %30 = arith.addf %29, %28 : vector<4x16xf32>
    %31 = arith.divf %29, %30 : vector<4x16xf32>
    %c0_21 = arith.constant 0 : index
    %c0_22 = arith.constant 0 : index
    %32 = vector.load %arg10[%c0_21, %c0_22] : memref<4x8xf32, #tpu.memory_space<vmem>>, vector<4x8xf32>
    %33 = vector.extract_strided_slice %20 {offsets = [0, 128], sizes = [8, 16], strides = [1, 1]} : vector<8x144xf32> to vector<8x16xf32>
    %cst_23 = arith.constant dense<0.000000e+00> : vector<4x16xf32>
    %34 = tpu.matmul %32, %33, %cst_23 {dimension_numbers = #tpu.dot_dimension_numbers<[1], [0], [0], [1], [0, 0, 1, 1], [], []>} : vector<4x8xf32>, vector<8x16xf32>, vector<4x16xf32> -> vector<4x16xf32>
    %c0_24 = arith.constant 0 : index
    %c0_25 = arith.constant 0 : index
    %35 = vector.load %arg11[%c0_24, %c0_25] : memref<4x1xf32, #tpu.memory_space<vmem>>, vector<4x1xf32>
    %36 = vector.broadcast %35 : vector<4x1xf32> to vector<4x16xf32>
    %37 = arith.addf %34, %36 : vector<4x16xf32>
    %38 = arith.negf %37 : vector<4x16xf32>
    %39 = math.exp %38 : vector<4x16xf32>
    %cst_26 = arith.constant 1.000000e+00 : f32
    %40 = vector.broadcast %cst_26 : f32 to vector<4x16xf32>
    %41 = arith.addf %40, %39 : vector<4x16xf32>
    %42 = arith.divf %40, %41 : vector<4x16xf32>
    %c0_27 = arith.constant 0 : index
    %c0_28 = arith.constant 0 : index
    %43 = vector.load %arg4[%c0_27, %c0_28] : memref<16x256xf32, #tpu.memory_space<vmem>>, vector<16x256xf32>
    %cst_29 = arith.constant dense<0.000000e+00> : vector<4x256xf32>
    %44 = tpu.matmul %31, %43, %cst_29 {dimension_numbers = #tpu.dot_dimension_numbers<[1], [0], [0], [1], [0, 0, 1, 1], [], []>} : vector<4x16xf32>, vector<16x256xf32>, vector<4x256xf32> -> vector<4x256xf32>
    %c0_30 = arith.constant 0 : index
    %c0_31 = arith.constant 0 : index
    %45 = vector.load %arg5[%c0_30, %c0_31] : memref<16x256xf32, #tpu.memory_space<vmem>>, vector<16x256xf32>
    %cst_32 = arith.constant dense<0.000000e+00> : vector<4x256xf32>
    %46 = tpu.matmul %42, %45, %cst_32 {dimension_numbers = #tpu.dot_dimension_numbers<[1], [0], [0], [1], [0, 0, 1, 1], [], []>} : vector<4x16xf32>, vector<16x256xf32>, vector<4x256xf32> -> vector<4x256xf32>
    %47 = arith.mulf %44, %46 : vector<4x256xf32>
    %48 = arith.mulf %1, %47 : vector<4x256xf32>
    %c0_33 = arith.constant 0 : index
    %c0_34 = arith.constant 0 : index
    %c0_35 = arith.constant 0 : index
    %49 = vector.load %arg12[%c0_33, %c0_34, %c0_35] : memref<1x4x256xf32, #tpu.memory_space<vmem>>, vector<1x4x256xf32>
    %50 = vector.shape_cast %49 : vector<1x4x256xf32> to vector<4x256xf32>
    %51 = vector.shape_cast %48 : vector<4x256xf32> to vector<1x4x256xf32>
    tpu.vector_store %arg12[%c0_33, %c0_34, %c0_35], %51 {strides = array<i32>} : memref<1x4x256xf32, #tpu.memory_space<vmem>>, vector<1x4x256xf32>,
    return
  }
  func.func @transform_0(%arg0: i32) -> (i32, i32, i32) {
    %c0_i32 = arith.constant 0 : i32
    %c0_i32_0 = arith.constant 0 : i32
    %c0_i32_1 = arith.constant 0 : i32
    return %arg0, %c0_i32, %c0_i32_0 : i32, i32, i32
  }
  func.func @transform_1(%arg0: i32) -> (i32, i32) {
    %c0_i32 = arith.constant 0 : i32
    %c0_i32_0 = arith.constant 0 : i32
    %c0_i32_1 = arith.constant 0 : i32
    return %c0_i32, %c0_i32_0 : i32, i32
  }
  func.func @transform_2(%arg0: i32) -> (i32, i32) {
    %c0_i32 = arith.constant 0 : i32
    %c0_i32_0 = arith.constant 0 : i32
    %c0_i32_1 = arith.constant 0 : i32
    return %c0_i32, %c0_i32_0 : i32, i32
  }
  func.func @transform_3(%arg0: i32) -> (i32, i32) {
    %c0_i32 = arith.constant 0 : i32
    %c0_i32_0 = arith.constant 0 : i32
    %c0_i32_1 = arith.constant 0 : i32
    return %c0_i32, %c0_i32_0 : i32, i32
  }
  func.func @transform_4(%arg0: i32) -> (i32, i32) {
    %c0_i32 = arith.constant 0 : i32
    %c0_i32_0 = arith.constant 0 : i32
    %c0_i32_1 = arith.constant 0 : i32
    return %c0_i32, %c0_i32_0 : i32, i32
  }
  func.func @transform_5(%arg0: i32) -> (i32, i32) {
    %c0_i32 = arith.constant 0 : i32
    %c0_i32_0 = arith.constant 0 : i32
    %c0_i32_1 = arith.constant 0 : i32
    return %c0_i32, %c0_i32_0 : i32, i32
  }
  func.func @transform_6(%arg0: i32) -> (i32, i32) {
    %c0_i32 = arith.constant 0 : i32
    %c0_i32_0 = arith.constant 0 : i32
    %c0_i32_1 = arith.constant 0 : i32
    return %c0_i32, %c0_i32_0 : i32, i32
  }
  func.func @transform_7(%arg0: i32) -> (i32, i32) {
    %c0_i32 = arith.constant 0 : i32
    %c0_i32_0 = arith.constant 0 : i32
    %c0_i32_1 = arith.constant 0 : i32
    return %c0_i32, %c0_i32_0 : i32, i32
  }
  func.func @transform_8(%arg0: i32) -> (i32, i32) {
    %c0_i32 = arith.constant 0 : i32
    %c0_i32_0 = arith.constant 0 : i32
    %c0_i32_1 = arith.constant 0 : i32
    return %c0_i32, %c0_i32_0 : i32, i32
  }
  func.func @transform_9(%arg0: i32) -> (i32, i32) {
    %c0_i32 = arith.constant 0 : i32
    %c0_i32_0 = arith.constant 0 : i32
    %c0_i32_1 = arith.constant 0 : i32
    return %c0_i32, %c0_i32_0 : i32, i32
  }
  func.func @transform_10(%arg0: i32) -> (i32, i32) {
    %c0_i32 = arith.constant 0 : i32
    %c0_i32_0 = arith.constant 0 : i32
    %c0_i32_1 = arith.constant 0 : i32
    return %c0_i32, %c0_i32_0 : i32, i32
  }
  func.func @transform_11(%arg0: i32) -> (i32, i32, i32) {
    %c0_i32 = arith.constant 0 : i32
    %c0_i32_0 = arith.constant 0 : i32
    %c0_i32_1 = arith.constant 0 : i32
    return %arg0, %c0_i32, %c0_i32_0 : i32, i32, i32
  }
}

</mosaic_0001>

<llo_original>
// kernel: tpu_custom_call.1
$region0: #{tpu_custom_call.1}
  #allocation0 [shape = 'u32[]', space=smem, size = 0x4, offset = 0x4, fixed_abs, tag = 'smem constant byte address 0x4 - core index']
  #allocation1 [shape = 'u32[144,128]{1,0:T(1,128)}', space=vmem, size = 0x12000, scoped, tag = 'internal scratch']
  %s0 = inlined_call_operand.vmem [shape: f32[2,4,256], index: 0, kind: input, shape index: {}]
  %s1 = inlined_call_operand.vmem [shape: f32[256,144], index: 1, kind: input, shape index: {}]
  %s2 = inlined_call_operand.vmem [shape: f32[1,144], index: 2, kind: input, shape index: {}]
  %s3 = inlined_call_operand.vmem [shape: f32[16,256], index: 3, kind: input, shape index: {}]
  %s4 = inlined_call_operand.vmem [shape: f32[16,256], index: 4, kind: input, shape index: {}]
  %s5 = inlined_call_operand.vmem [shape: f32[8,4], index: 5, kind: input, shape index: {}]
  %s6 = inlined_call_operand.vmem [shape: f32[8,1], index: 6, kind: input, shape index: {}]
  %s7 = inlined_call_operand.vmem [shape: f32[4,8], index: 7, kind: input, shape index: {}]
  %s8 = inlined_call_operand.vmem [shape: f32[4,1], index: 8, kind: input, shape index: {}]
  %s9 = inlined_call_operand.vmem [shape: f32[4,8], index: 9, kind: input, shape index: {}]
  %s10 = inlined_call_operand.vmem [shape: f32[4,1], index: 10, kind: input, shape index: {}]
  %s11 = inlined_call_operand.hbm [shape: f32[2,4,256], index: 11, kind: output, shape index: {}]
  %s12 = sld [smem:[#allocation0]]
  $region77: #{tpu_custom_call.1} parent=0
    _
  %s14 = ssub.s32 1, %s12
  %s15 = scalar_select 0, %s14, %s12
  $region1: #{tpu_custom_call.1} parent=0
    #allocation2 [shape = 'u8[8192]{0}', space=vmem, size = 0x2000, scoped, tag = 'output window, operand 0']
    #allocation3 [shape = 's32[2]{0}', space=sflag, size = 0x8, scoped, tag = 'scoped memory for tpu_custom_call.1']
    %16 = vsyncpa [#allocation3], 0
    %s17 = scalar_lea.sflag [#allocation3], 1
    %18 = vsyncpa %s17, 0
    loop: start=0, step=1, limit=4
    $region2: #{tpu_custom_call.1} parent=1 // loop_pre_header
      _
    $region3: #{tpu_custom_call.1} parent=1 // loop_header
      %s20 = sphi 0, %s24
      %p21 = scmp.ge.s32.totalorder %s20, 4
      %s30 = sphi 0, %s32
      %s33 = sphi 0, %s30
      %s34 = sphi 0, %s33
      %s50 = sphi 0, %s34
      %s54 = sphi 0, %s54
      %s56 = sphi 0, %s54
      %s57 = sphi 0, %s56
      %s71 = sphi 0, %s57
      %s75 = sphi 0, %s75
      %s77 = sphi 0, %s75
      %s78 = sphi 0, %s77
      %s92 = sphi 0, %s78
      %s96 = sphi 0, %s96
      %s98 = sphi 0, %s96
      %s99 = sphi 0, %s98
      %s113 = sphi 0, %s99
      %s117 = sphi 0, %s117
      %s119 = sphi 0, %s117
      %s120 = sphi 0, %s119
      %s134 = sphi 0, %s120
      %s138 = sphi 0, %s138
      %s140 = sphi 0, %s138
      %s141 = sphi 0, %s140
      %s155 = sphi 0, %s141
      %s159 = sphi 0, %s159
      %s161 = sphi 0, %s159
      %s162 = sphi 0, %s161
      %s176 = sphi 0, %s162
      %s180 = sphi 0, %s180
      %s182 = sphi 0, %s180
      %s183 = sphi 0, %s182
      %s197 = sphi 0, %s183
      %s201 = sphi 0, %s201
      %s203 = sphi 0, %s201
      %s204 = sphi 0, %s203
      %s218 = sphi 0, %s204
      %s222 = sphi 0, %s222
      %s224 = sphi 0, %s222
      %s225 = sphi 0, %s224
      %s239 = sphi 0, %s225
      %s243 = sphi 0, %s243
      %s245 = sphi 0, %s243
      %s246 = sphi 0, %s245
      %s260 = sphi 0, %s246
      %s266 = sphi 0, %s268
      %s269 = sphi 0, %s266
      %s270 = sphi 0, %s269
      %s286 = sphi 0, %s270
    $region4: #{tpu_custom_call.1} parent=1 // loop_header_branch
      %23 = sbr.rel (%p21) target = $region8
    $region5: #{tpu_custom_call.1} parent=1 // loop_body
      %s25 = ssub.s32 %s20, 1
      %s26 = ssub.s32 %s20, 2
      %s27 = sadd.s32 %s20, 1
      %s28 = ssub.s32 %s20, %s27
      %p29 = scmp.eq.s32.totalorder %s28, 0
      %s31 = sadd.s32 %s30, 1
      %s32 = scalar_select %p29, %s30, %s31
      %p35 = pneg %p29
      %p36 = scmp.eq.s32.totalorder %s20, 1
      %p37 = por %p35, %p36
      %p38 = scmp.ne.s32.totalorder %s30, %s33
      %p39 = scmp.eq.s32.totalorder %s20, 0
      %p40 = por %p38, %p39
      %p41 = scmp.ne.s32.totalorder %s30, %s33
      %p42 = scmp.eq.s32.totalorder %s25, 1
      %p43 = por %p41, %p42
      %p44 = scmp.ne.s32.totalorder %s33, %s34
      %p45 = scmp.eq.s32.totalorder %s25, 0
      %p46 = por %p44, %p45
      %p47 = scmp.ne.s32.totalorder %s33, %s34
      %p48 = scmp.eq.s32.totalorder %s26, 1
      %p49 = por %p47, %p48
      %p51 = scmp.ne.s32.totalorder %s34, %s50
      %p52 = scmp.eq.s32.totalorder %s26, 0
      %p53 = por %p51, %p52
      %s55 = sadd.s32 %s54, 1
      %p58 = scmp.eq.s32.totalorder %s20, 1
      %p59 = scmp.ne.s32.totalorder %s54, %s56
      %p60 = scmp.eq.s32.totalorder %s20, 0
      %p61 = por %p59, %p60
      %p62 = scmp.ne.s32.totalorder %s54, %s56
      %p63 = scmp.eq.s32.totalorder %s25, 1
      %p64 = por %p62, %p63
      %p65 = scmp.ne.s32.totalorder %s56, %s57
      %p66 = scmp.eq.s32.totalorder %s25, 0
      %p67 = por %p65, %p66
      %p68 = scmp.ne.s32.totalorder %s56, %s57
      %p69 = scmp.eq.s32.totalorder %s26, 1
      %p70 = por %p68, %p69
      %p72 = scmp.ne.s32.totalorder %s57, %s71
      %p73 = scmp.eq.s32.totalorder %s26, 0
      %p74 = por %p72, %p73
      %s76 = sadd.s32 %s75, 1
      %p79 = scmp.eq.s32.totalorder %s20, 1
      %p80 = scmp.ne.s32.totalorder %s75, %s77
      %p81 = scmp.eq.s32.totalorder %s20, 0
      %p82 = por %p80, %p81
      %p83 = scmp.ne.s32.totalorder %s75, %s77
      %p84 = scmp.eq.s32.totalorder %s25, 1
      %p85 = por %p83, %p84
      %p86 = scmp.ne.s32.totalorder %s77, %s78
      %p87 = scmp.eq.s32.totalorder %s25, 0
      %p88 = por %p86, %p87
      %p89 = scmp.ne.s32.totalorder %s77, %s78
      %p90 = scmp.eq.s32.totalorder %s26, 1
      %p91 = por %p89, %p90
      %p93 = scmp.ne.s32.totalorder %s78, %s92
      %p94 = scmp.eq.s32.totalorder %s26, 0
      %p95 = por %p93, %p94
      %s97 = sadd.s32 %s96, 1
      %p100 = scmp.eq.s32.totalorder %s20, 1
      %p101 = scmp.ne.s32.totalorder %s96, %s98
      %p102 = scmp.eq.s32.totalorder %s20, 0
      %p103 = por %p101, %p102
      %p104 = scmp.ne.s32.totalorder %s96, %s98
      %p105 = scmp.eq.s32.totalorder %s25, 1
      %p106 = por %p104, %p105
      %p107 = scmp.ne.s32.totalorder %s98, %s99
      %p108 = scmp.eq.s32.totalorder %s25, 0
      %p109 = por %p107, %p108
      %p110 = scmp.ne.s32.totalorder %s98, %s99
      %p111 = scmp.eq.s32.totalorder %s26, 1
      %p112 = por %p110, %p111
      %p114 = scmp.ne.s32.totalorder %s99, %s113
      %p115 = scmp.eq.s32.totalorder %s26, 0
      %p116 = por %p114, %p115
      %s118 = sadd.s32 %s117, 1
      %p121 = scmp.eq.s32.totalorder %s20, 1
      %p122 = scmp.ne.s32.totalorder %s117, %s119
      %p123 = scmp.eq.s32.totalorder %s20, 0
      %p124 = por %p122, %p123
      %p125 = scmp.ne.s32.totalorder %s117, %s119
      %p126 = scmp.eq.s32.totalorder %s25, 1
      %p127 = por %p125, %p126
      %p128 = scmp.ne.s32.totalorder %s119, %s120
      %p129 = scmp.eq.s32.totalorder %s25, 0
      %p130 = por %p128, %p129
      %p131 = scmp.ne.s32.totalorder %s119, %s120
      %p132 = scmp.eq.s32.totalorder %s26, 1
      %p133 = por %p131, %p132
      %p135 = scmp.ne.s32.totalorder %s120, %s134
      %p136 = scmp.eq.s32.totalorder %s26, 0
      %p137 = por %p135, %p136
      %s139 = sadd.s32 %s138, 1
      %p142 = scmp.eq.s32.totalorder %s20, 1
      %p143 = scmp.ne.s32.totalorder %s138, %s140
      %p144 = scmp.eq.s32.totalorder %s20, 0
      %p145 = por %p143, %p144
      %p146 = scmp.ne.s32.totalorder %s138, %s140
      %p147 = scmp.eq.s32.totalorder %s25, 1
      %p148 = por %p146, %p147
      %p149 = scmp.ne.s32.totalorder %s140, %s141
      %p150 = scmp.eq.s32.totalorder %s25, 0
      %p151 = por %p149, %p150
      %p152 = scmp.ne.s32.totalorder %s140, %s141
      %p153 = scmp.eq.s32.totalorder %s26, 1
      %p154 = por %p152, %p153
      %p156 = scmp.ne.s32.totalorder %s141, %s155
      %p157 = scmp.eq.s32.totalorder %s26, 0
      %p158 = por %p156, %p157
      %s160 = sadd.s32 %s159, 1
      %p163 = scmp.eq.s32.totalorder %s20, 1
      %p164 = scmp.ne.s32.totalorder %s159, %s161
      %p165 = scmp.eq.s32.totalorder %s20, 0
      %p166 = por %p164, %p165
      %p167 = scmp.ne.s32.totalorder %s159, %s161
      %p168 = scmp.eq.s32.totalorder %s25, 1
      %p169 = por %p167, %p168
      %p170 = scmp.ne.s32.totalorder %s161, %s162
      %p171 = scmp.eq.s32.totalorder %s25, 0
      %p172 = por %p170, %p171
      %p173 = scmp.ne.s32.totalorder %s161, %s162
      %p174 = scmp.eq.s32.totalorder %s26, 1
      %p175 = por %p173, %p174
      %p177 = scmp.ne.s32.totalorder %s162, %s176
      %p178 = scmp.eq.s32.totalorder %s26, 0
      %p179 = por %p177, %p178
      %s181 = sadd.s32 %s180, 1
      %p184 = scmp.eq.s32.totalorder %s20, 1
      %p185 = scmp.ne.s32.totalorder %s180, %s182
      %p186 = scmp.eq.s32.totalorder %s20, 0
      %p187 = por %p185, %p186
      %p188 = scmp.ne.s32.totalorder %s180, %s182
      %p189 = scmp.eq.s32.totalorder %s25, 1
      %p190 = por %p188, %p189
      %p191 = scmp.ne.s32.totalorder %s182, %s183
      %p192 = scmp.eq.s32.totalorder %s25, 0
      %p193 = por %p191, %p192
      %p194 = scmp.ne.s32.totalorder %s182, %s183
      %p195 = scmp.eq.s32.totalorder %s26, 1
      %p196 = por %p194, %p195
      %p198 = scmp.ne.s32.totalorder %s183, %s197
      %p199 = scmp.eq.s32.totalorder %s26, 0
      %p200 = por %p198, %p199
      %s202 = sadd.s32 %s201, 1
      %p205 = scmp.eq.s32.totalorder %s20, 1
      %p206 = scmp.ne.s32.totalorder %s201, %s203
      %p207 = scmp.eq.s32.totalorder %s20, 0
      %p208 = por %p206, %p207
      %p209 = scmp.ne.s32.totalorder %s201, %s203
      %p210 = scmp.eq.s32.totalorder %s25, 1
      %p211 = por %p209, %p210
      %p212 = scmp.ne.s32.totalorder %s203, %s204
      %p213 = scmp.eq.s32.totalorder %s25, 0
      %p214 = por %p212, %p213
      %p215 = scmp.ne.s32.totalorder %s203, %s204
      %p216 = scmp.eq.s32.totalorder %s26, 1
      %p217 = por %p215, %p216
      %p219 = scmp.ne.s32.totalorder %s204, %s218
      %p220 = scmp.eq.s32.totalorder %s26, 0
      %p221 = por %p219, %p220
      %s223 = sadd.s32 %s222, 1
      %p226 = scmp.eq.s32.totalorder %s20, 1
      %p227 = scmp.ne.s32.totalorder %s222, %s224
      %p228 = scmp.eq.s32.totalorder %s20, 0
      %p229 = por %p227, %p228
      %p230 = scmp.ne.s32.totalorder %s222, %s224
      %p231 = scmp.eq.s32.totalorder %s25, 1
      %p232 = por %p230, %p231
      %p233 = scmp.ne.s32.totalorder %s224, %s225
      %p234 = scmp.eq.s32.totalorder %s25, 0
      %p235 = por %p233, %p234
      %p236 = scmp.ne.s32.totalorder %s224, %s225
      %p237 = scmp.eq.s32.totalorder %s26, 1
      %p238 = por %p236, %p237
      %p240 = scmp.ne.s32.totalorder %s225, %s239
      %p241 = scmp.eq.s32.totalorder %s26, 0
      %p242 = por %p240, %p241
      %s244 = sadd.s32 %s243, 1
      %p247 = scmp.eq.s32.totalorder %s20, 1
      %p248 = scmp.ne.s32.totalorder %s243, %s245
      %p249 = scmp.eq.s32.totalorder %s20, 0
      %p250 = por %p248, %p249
      %p251 = scmp.ne.s32.totalorder %s243, %s245
      %p252 = scmp.eq.s32.totalorder %s25, 1
      %p253 = por %p251, %p252
      %p254 = scmp.ne.s32.totalorder %s245, %s246
      %p255 = scmp.eq.s32.totalorder %s25, 0
      %p256 = por %p254, %p255
      %p257 = scmp.ne.s32.totalorder %s245, %s246
      %p258 = scmp.eq.s32.totalorder %s26, 1
      %p259 = por %p257, %p258
      %p261 = scmp.ne.s32.totalorder %s246, %s260
      %p262 = scmp.eq.s32.totalorder %s26, 0
      %p263 = por %p261, %p262
      %s264 = ssub.s32 %s20, %s27
      %p265 = scmp.eq.s32.totalorder %s264, 0
      %s267 = sadd.s32 %s266, 1
      %s268 = scalar_select %p265, %s266, %s267
      %p271 = pneg %p265
      %p272 = scmp.eq.s32.totalorder %s20, 1
      %p273 = por %p271, %p272
      %p274 = scmp.ne.s32.totalorder %s266, %s269
      %p275 = scmp.eq.s32.totalorder %s20, 0
      %p276 = por %p274, %p275
      %p277 = scmp.ne.s32.totalorder %s266, %s269
      %p278 = scmp.eq.s32.totalorder %s25, 1
      %p279 = por %p277, %p278
      %p280 = scmp.ne.s32.totalorder %s269, %s270
      %p281 = scmp.eq.s32.totalorder %s25, 0
      %p282 = por %p280, %p281
      %p283 = scmp.ne.s32.totalorder %s269, %s270
      %p284 = scmp.eq.s32.totalorder %s26, 1
      %p285 = por %p283, %p284
      %p287 = scmp.ne.s32.totalorder %s270, %s286
      %p288 = scmp.eq.s32.totalorder %s26, 0
      %p289 = por %p287, %p288
      %p290 = scmp.le.s32.totalorder 1, %s20
      %p291 = scmp.lt.s32.totalorder %s20, 3
      %p292 = pnand %p290, %p291
      %p293 = pneg %p292
      // Predicated region
      $region9: #{tpu_custom_call.1} parent=5 // pred_check
        _
      $region10: #{tpu_custom_call.1} parent=5 // pred_check_branch
        %295 = sbr.rel (%p292) target = $region12
      $region11: #{tpu_custom_call.1} parent=5 // pred_region
        %s296 = ssub.s32 %s20, 1
        // Predicated region
        $region13: #{tpu_custom_call.1} parent=11 // pred_check
          %p297 = pneg %p67
        $region14: #{tpu_custom_call.1} parent=11 // pred_check_branch
          %299 = sbr.rel (%p297) target = $region16
        $region15: #{tpu_custom_call.1} parent=11 // pred_region
          _
        $region16: #{tpu_custom_call.1} parent=11 // pred_fallthru
          _
        // Predicated region
        $region17: #{tpu_custom_call.1} parent=11 // pred_check
          %p300 = pneg %p88
        $region18: #{tpu_custom_call.1} parent=11 // pred_check_branch
          %302 = sbr.rel (%p300) target = $region20
        $region19: #{tpu_custom_call.1} parent=11 // pred_region
          _
        $region20: #{tpu_custom_call.1} parent=11 // pred_fallthru
          _
        // Predicated region
        $region21: #{tpu_custom_call.1} parent=11 // pred_check
          %p303 = pneg %p109
        $region22: #{tpu_custom_call.1} parent=11 // pred_check_branch
          %305 = sbr.rel (%p303) target = $region24
        $region23: #{tpu_custom_call.1} parent=11 // pred_region
          _
        $region24: #{tpu_custom_call.1} parent=11 // pred_fallthru
          _
        // Predicated region
        $region25: #{tpu_custom_call.1} parent=11 // pred_check
          %p306 = pneg %p130
        $region26: #{tpu_custom_call.1} parent=11 // pred_check_branch
          %308 = sbr.rel (%p306) target = $region28
        $region27: #{tpu_custom_call.1} parent=11 // pred_region
          _
        $region28: #{tpu_custom_call.1} parent=11 // pred_fallthru
          _
        // Predicated region
        $region29: #{tpu_custom_call.1} parent=11 // pred_check
          %p309 = pneg %p151
        $region30: #{tpu_custom_call.1} parent=11 // pred_check_branch
          %311 = sbr.rel (%p309) target = $region32
        $region31: #{tpu_custom_call.1} parent=11 // pred_region
          _
        $region32: #{tpu_custom_call.1} parent=11 // pred_fallthru
          _
        // Predicated region
        $region33: #{tpu_custom_call.1} parent=11 // pred_check
          %p312 = pneg %p172
        $region34: #{tpu_custom_call.1} parent=11 // pred_check_branch
          %314 = sbr.rel (%p312) target = $region36
        $region35: #{tpu_custom_call.1} parent=11 // pred_region
          _
        $region36: #{tpu_custom_call.1} parent=11 // pred_fallthru
          _
        // Predicated region
        $region37: #{tpu_custom_call.1} parent=11 // pred_check
          %p315 = pneg %p193
        $region38: #{tpu_custom_call.1} parent=11 // pred_check_branch
          %317 = sbr.rel (%p315) target = $region40
        $region39: #{tpu_custom_call.1} parent=11 // pred_region
          _
        $region40: #{tpu_custom_call.1} parent=11 // pred_fallthru
          _
        // Predicated region
        $region41: #{tpu_custom_call.1} parent=11 // pred_check
          %p318 = pneg %p214
        $region42: #{tpu_custom_call.1} parent=11 // pred_check_branch
          %320 = sbr.rel (%p318) target = $region44
        $region43: #{tpu_custom_call.1} parent=11 // pred_region
          _
        $region44: #{tpu_custom_call.1} parent=11 // pred_fallthru
          _
        // Predicated region
        $region45: #{tpu_custom_call.1} parent=11 // pred_check
          %p321 = pneg %p235
        $region46: #{tpu_custom_call.1} parent=11 // pred_check_branch
          %323 = sbr.rel (%p321) target = $region48
        $region47: #{tpu_custom_call.1} parent=11 // pred_region
          _
        $region48: #{tpu_custom_call.1} parent=11 // pred_fallthru
          _
        // Predicated region
        $region49: #{tpu_custom_call.1} parent=11 // pred_check
          %p324 = pneg %p256
        $region50: #{tpu_custom_call.1} parent=11 // pred_check_branch
          %326 = sbr.rel (%p324) target = $region52
        $region51: #{tpu_custom_call.1} parent=11 // pred_region
          _
        $region52: #{tpu_custom_call.1} parent=11 // pred_fallthru
          _
      $region12: #{tpu_custom_call.1} parent=5 // pred_fallthru
        _
      %p327 = scmp.lt.s32.totalorder %s20, 2
      // Predicated region
      $region53: #{tpu_custom_call.1} parent=5 // pred_check
        %p328 = pneg %p327
      $region54: #{tpu_custom_call.1} parent=5 // pred_check_branch
        %330 = sbr.rel (%p328) target = $region56
      $region55: #{tpu_custom_call.1} parent=5 // pred_region
        // Predicated region
        $region57: #{tpu_custom_call.1} parent=55 // pred_check
          %p331 = pneg %p40
        $region58: #{tpu_custom_call.1} parent=55 // pred_check_branch
          %333 = sbr.rel (%p331) target = $region60
        $region59: #{tpu_custom_call.1} parent=55 // pred_region
          %p334 = scmp.lt.s32.totalorder %s20, 1
          %s335 = scalar_select %p334, %s20, 1
          %s336 = smul.addr %s335, 2
          %s337 = smul.addr %s336, 4
          %s338 = scalar_lea.vmem %s0, %s337
        $region60: #{tpu_custom_call.1} parent=55 // pred_fallthru
          _
      $region56: #{tpu_custom_call.1} parent=5 // pred_fallthru
        _
      %p339 = scmp.le.s32.totalorder 1, %s20
      %p340 = scmp.lt.s32.totalorder %s20, 3
      %p341 = pnand %p339, %p340
      %p342 = pneg %p341
      // Predicated region
      $region61: #{tpu_custom_call.1} parent=5 // pred_check
        _
      $region62: #{tpu_custom_call.1} parent=5 // pred_check_branch
        %344 = sbr.rel (%p341) target = $region64
      $region63: #{tpu_custom_call.1} parent=5 // pred_region
        %s345 = ssub.s32 %s20, 1
        %p346 = scmp.lt.s32.totalorder %s25, 1
        %s347 = scalar_select %p346, %s25, 1
        %s348 = smul.addr %s347, 2
        %s349 = smul.addr %s348, 4
        %s350 = scalar_lea.vmem %s0, %s349
        %p351 = pneg %p46
        %p352 = pneg %p43
        %p353 = pneg %p67
        %p354 = pneg %p64
        %p355 = pneg %p88
        %p356 = pneg %p85
        %p357 = pneg %p109
        %p358 = pneg %p106
        %p359 = pneg %p130
        %p360 = pneg %p127
        %p361 = pneg %p151
        %p362 = pneg %p148
        %p363 = pneg %p172
        %p364 = pneg %p169
        %p365 = pneg %p193
        %p366 = pneg %p190
        %p367 = pneg %p214
        %p368 = pneg %p211
        %p369 = pneg %p235
        %p370 = pneg %p232
        %p371 = pneg %p256
        %p372 = pneg %p253
        %p373 = pneg %p282
        %p374 = pneg %p279
        %s375 = sand.u32 %s269, 1
        %s376 = scalar_lea.sflag [#allocation3], %s375
        %s377 = sand.u32 %s269, 1
        %s378 = smul.addr %s377, 8
        %s379 = scalar_lea.vmem [#allocation2], %s378
        %p380 = scmp.lt.s32.totalorder %s25, 1
        %s381 = scalar_select %p380, %s25, 1
        %s382 = smul.addr %s381, 2
        %s383 = smul.addr %s382, 4
        %s384 = scalar_lea.vmem %s0, %s383
        %v385 = vld [vmem:[%s384] sm:$0xff]
        %v386 = vld [vmem:[%s1] sm:$0xff]
        %v387 = vld [vmem:[%s1 + $0x8] sm:$0xff]
        %v388 = vld [vmem:[%s1 + $0x10] sm:$0xff]
        %v389 = vld [vmem:[%s1 + $0x18] sm:$0xff]
        %v390 = vld [vmem:[%s1 + $0x20] sm:$0xff]
        %v391 = vld [vmem:[%s1 + $0x28] sm:$0xff]
        %v392 = vld [vmem:[%s1 + $0x30] sm:$0xff]
        %v393 = vld [vmem:[%s1 + $0x38] sm:$0xff]
        %v394 = vld [vmem:[%s1 + $0x40] sm:$0xff]
        %v395 = vld [vmem:[%s1 + $0x48] sm:$0xff]
        %v396 = vld [vmem:[%s1 + $0x50] sm:$0xff]
        %v397 = vld [vmem:[%s1 + $0x58] sm:$0xff]
        %v398 = vld [vmem:[%s1 + $0x60] sm:$0xff]
        %v399 = vld [vmem:[%s1 + $0x68] sm:$0xff]
        %v400 = vld [vmem:[%s1 + $0x70] sm:$0xff]
        %v401 = vld [vmem:[%s1 + $0x78] sm:$0xff]
        %v402 = vld [vmem:[%s1 + $0x80] sm:$0xff]
        %v403 = vld [vmem:[%s1 + $0x88] sm:$0xff]
        %v404 = vld [vmem:[%s1 + $0x90] sm:$0xff]
        %v405 = vld [vmem:[%s1 + $0x98] sm:$0xff]
        %v406 = vld [vmem:[%s1 + $0xa0] sm:$0xff]
        %v407 = vld [vmem:[%s1 + $0xa8] sm:$0xff]
        %v408 = vld [vmem:[%s1 + $0xb0] sm:$0xff]
        %v409 = vld [vmem:[%s1 + $0xb8] sm:$0xff]
        %v410 = vld [vmem:[%s1 + $0xc0] sm:$0xff]
        %v411 = vld [vmem:[%s1 + $0xc8] sm:$0xff]
        %v412 = vld [vmem:[%s1 + $0xd0] sm:$0xff]
        %v413 = vld [vmem:[%s1 + $0xd8] sm:$0xff]
        %v414 = vld [vmem:[%s1 + $0xe0] sm:$0xff]
        %v415 = vld [vmem:[%s1 + $0xe8] sm:$0xff]
        %v416 = vld [vmem:[%s1 + $0xf0] sm:$0xff]
        %v417 = vld [vmem:[%s1 + $0xf8] sm:$0xff]
        %v418 = vld [vmem:[%s1 + $0x100] sm:$0xff]
        %v419 = vld [vmem:[%s1 + $0x108] sm:$0xff]
        %v420 = vld [vmem:[%s1 + $0x110] sm:$0xff]
        %v421 = vld [vmem:[%s1 + $0x118] sm:$0xff]
        %v422 = vld [vmem:[%s1 + $0x120] sm:$0xff]
        %v423 = vld [vmem:[%s1 + $0x128] sm:$0xff]
        %v424 = vld [vmem:[%s1 + $0x130] sm:$0xff]
        %v425 = vld [vmem:[%s1 + $0x138] sm:$0xff]
        %v426 = vld [vmem:[%s1 + $0x140] sm:$0xff]
        %v427 = vld [vmem:[%s1 + $0x148] sm:$0xff]
        %v428 = vld [vmem:[%s1 + $0x150] sm:$0xff]
        %v429 = vld [vmem:[%s1 + $0x158] sm:$0xff]
        %v430 = vld [vmem:[%s1 + $0x160] sm:$0xff]
        %v431 = vld [vmem:[%s1 + $0x168] sm:$0xff]
        %v432 = vld [vmem:[%s1 + $0x170] sm:$0xff]
        %v433 = vld [vmem:[%s1 + $0x178] sm:$0xff]
        %v434 = vld [vmem:[%s1 + $0x180] sm:$0xff]
        %v435 = vld [vmem:[%s1 + $0x188] sm:$0xff]
        %v436 = vld [vmem:[%s1 + $0x190] sm:$0xff]
        %v437 = vld [vmem:[%s1 + $0x198] sm:$0xff]
        %v438 = vld [vmem:[%s1 + $0x1a0] sm:$0xff]
        %v439 = vld [vmem:[%s1 + $0x1a8] sm:$0xff]
        %v440 = vld [vmem:[%s1 + $0x1b0] sm:$0xff]
        %v441 = vld [vmem:[%s1 + $0x1b8] sm:$0xff]
        %v442 = vld [vmem:[%s1 + $0x1c0] sm:$0xff]
        %v443 = vld [vmem:[%s1 + $0x1c8] sm:$0xff]
        %v444 = vld [vmem:[%s1 + $0x1d0] sm:$0xff]
        %v445 = vld [vmem:[%s1 + $0x1d8] sm:$0xff]
        %v446 = vld [vmem:[%s1 + $0x1e0] sm:$0xff]
        %v447 = vld [vmem:[%s1 + $0x1e8] sm:$0xff]
        %v448 = vld [vmem:[%s1 + $0x1f0] sm:$0xff]
        %v449 = vld [vmem:[%s1 + $0x1f8] sm:$0xff]
        %v451 = vcombine.high %v385, %v385
        %453 = vmatprep.subr.mxu0 %v417
        %454 = vmatpush1.msra.mxu0 %v416
        %455 = vmatprep.subr.mxu0 %v415
        %456 = vmatpush1.msra.mxu0 %v414
        %457 = vmatprep.subr.mxu0 %v413
        %458 = vmatpush1.msra.mxu0 %v412
        %459 = vmatprep.subr.mxu0 %v411
        %460 = vmatpush1.msra.mxu0 %v410
        %461 = vmatprep.subr.mxu0 %v409
        %462 = vmatpush1.msra.mxu0 %v408
        %463 = vmatprep.subr.mxu0 %v407
        %464 = vmatpush1.msra.mxu0 %v406
        %465 = vmatprep.subr.mxu0 %v405
        %466 = vmatpush1.msra.mxu0 %v404
        %467 = vmatprep.subr.mxu0 %v403
        %468 = vmatpush1.msra.mxu0 %v402
        %469 = vmatprep.subr.mxu0 %v401
        %470 = vmatpush1.msra.mxu0 %v400
        %471 = vmatprep.subr.mxu0 %v399
        %472 = vmatpush1.msra.mxu0 %v398
        %473 = vmatprep.subr.mxu0 %v397
        %474 = vmatpush1.msra.mxu0 %v396
        %475 = vmatprep.subr.mxu0 %v395
        %476 = vmatpush1.msra.mxu0 %v394
        %477 = vmatprep.subr.mxu0 %v393
        %478 = vmatpush1.msra.mxu0 %v392
        %479 = vmatprep.subr.mxu0 %v391
        %480 = vmatpush1.msra.mxu0 %v390
        %481 = vmatprep.subr.mxu0 %v389
        %482 = vmatpush1.msra.mxu0 %v388
        %483 = vmatprep.subr.mxu0 %v387
        %484 = vmatpush1.msra.mxu0 %v386
        %485 = vmatprep.subr.mxu0 %v449
        %486 = vmatpush2.msra.mxu0 %v448
        %487 = vmatprep.subr.mxu0 %v447
        %488 = vmatpush2.msra.mxu0 %v446
        %489 = vmatprep.subr.mxu0 %v445
        %490 = vmatpush2.msra.mxu0 %v444
        %491 = vmatprep.subr.mxu0 %v443
        %492 = vmatpush2.msra.mxu0 %v442
        %493 = vmatprep.subr.mxu0 %v441
        %494 = vmatpush2.msra.mxu0 %v440
        %495 = vmatprep.subr.mxu0 %v439
        %496 = vmatpush2.msra.mxu0 %v438
        %497 = vmatprep.subr.mxu0 %v437
        %498 = vmatpush2.msra.mxu0 %v436
        %499 = vmatprep.subr.mxu0 %v435
        %500 = vmatpush2.msra.mxu0 %v434
        %501 = vmatprep.subr.mxu0 %v433
        %502 = vmatpush2.msra.mxu0 %v432
        %503 = vmatprep.subr.mxu0 %v431
        %504 = vmatpush2.msra.mxu0 %v430
        %505 = vmatprep.subr.mxu0 %v429
        %506 = vmatpush2.msra.mxu0 %v428
        %507 = vmatprep.subr.mxu0 %v427
        %508 = vmatpush2.msra.mxu0 %v426
        %509 = vmatprep.subr.mxu0 %v425
        %510 = vmatpush2.msra.mxu0 %v424
        %511 = vmatprep.subr.mxu0 %v423
        %512 = vmatpush2.msra.mxu0 %v422
        %513 = vmatprep.subr.mxu0 %v421
        %514 = vmatpush2.msra.mxu0 %v420
        %515 = vmatprep.subr.mxu0 %v419
        %516 = vmatpush2.msra.mxu0 %v418
        %517 = vmatprep.mubr.f32.mxu0 %v451
        %518 = vmatmul.mubr.f32.gmra.mxu0 %v385
        %v519 = vpop.f32.mrf.mxu0
        %v520 = vadd.f32 0.0, %v519
        %v521 = vpop.f32.mrf.mxu0
        %v522 = vadd.f32 0.0, %v521
        %523 = vdwg.mxu0
        %v524 = vld [vmem:[%s5] sm:$0xff]
        %vm525 = vcmask 31744
        %v527 = vsel %vm525, %v524, 0
        %vm529 = vcmask 1043456
        %v531 = vsel %vm529, %v520, 0
        %v534 = vsel %vm529, %v522, 0
        %536 = vmatprep.subr.mxu0 0.0
        %537 = vmatpush1.msra.mxu0 0.0
        %538 = vmatprep.subr.mxu0 0.0
        %539 = vmatpush1.msra.mxu0 0.0
        %540 = vmatprep.subr.mxu0 0.0
        %541 = vmatpush1.msra.mxu0 0.0
        %542 = vmatprep.subr.mxu0 0.0
        %543 = vmatpush1.msra.mxu0 0.0
        %544 = vmatprep.subr.mxu0 0.0
        %545 = vmatpush1.msra.mxu0 0.0
        %546 = vmatprep.subr.mxu0 0.0
        %547 = vmatpush1.msra.mxu0 0.0
        %548 = vmatprep.subr.mxu0 0.0
        %549 = vmatpush1.msra.mxu0 0.0
        %550 = vmatprep.subr.mxu0 0.0
        %551 = vmatpush1.msra.mxu0 0.0
        %552 = vmatprep.subr.mxu0 0.0
        %553 = vmatpush1.msra.mxu0 0.0
        %554 = vmatprep.subr.mxu0 0.0
        %555 = vmatpush1.msra.mxu0 0.0
        %556 = vmatprep.subr.mxu0 0.0
        %557 = vmatpush1.msra.mxu0 0.0
        %558 = vmatprep.subr.mxu0 0.0
        %559 = vmatpush1.msra.mxu0 0.0
        %560 = vmatprep.subr.mxu0 0.0
        %561 = vmatpush1.msra.mxu0 0.0
        %562 = vmatprep.subr.mxu0 0.0
        %563 = vmatpush1.msra.mxu0 0.0
        %564 = vmatprep.subr.mxu0 0.0
        %565 = vmatpush1.msra.mxu0 0.0
        %566 = vmatprep.subr.mxu0 %v534
        %567 = vmatpush1.msra.mxu0 %v531
        %568 = vmatprep.subr.mxu0 0.0
        %569 = vmatpush2.msra.mxu0 0.0
        %570 = vmatprep.subr.mxu0 0.0
        %571 = vmatpush2.msra.mxu0 0.0
        %572 = vmatprep.subr.mxu0 0.0
        %573 = vmatpush2.msra.mxu0 0.0
        %574 = vmatprep.subr.mxu0 0.0
        %575 = vmatpush2.msra.mxu0 0.0
        %576 = vmatprep.subr.mxu0 0.0
        %577 = vmatpush2.msra.mxu0 0.0
        %578 = vmatprep.subr.mxu0 0.0
        %579 = vmatpush2.msra.mxu0 0.0
        %580 = vmatprep.subr.mxu0 0.0
        %581 = vmatpush2.msra.mxu0 0.0
        %582 = vmatprep.subr.mxu0 0.0
        %583 = vmatpush2.msra.mxu0 0.0
        %584 = vmatprep.subr.mxu0 0.0
        %585 = vmatpush2.msra.mxu0 0.0
        %586 = vmatprep.subr.mxu0 0.0
        %587 = vmatpush2.msra.mxu0 0.0
        %588 = vmatprep.subr.mxu0 0.0
        %589 = vmatpush2.msra.mxu0 0.0
        %590 = vmatprep.subr.mxu0 0.0
        %591 = vmatpush2.msra.mxu0 0.0
        %592 = vmatprep.subr.mxu0 0.0
        %593 = vmatpush2.msra.mxu0 0.0
        %594 = vmatprep.subr.mxu0 0.0
        %595 = vmatpush2.msra.mxu0 0.0
        %596 = vmatprep.subr.mxu0 0.0
        %597 = vmatpush2.msra.mxu0 0.0
        %598 = vmatprep.subr.mxu0 0.0
        %599 = vmatpush2.msra.mxu0 0.0
        %600 = vmatprep.mubr.f32.mxu0 0.0
        %601 = vmatmul.mubr.f32.gmra.mxu0 %v527
        %v602 = vpop.f32.mrf.mxu0
        %v603 = vadd.f32 0.0, %v602
        %v604 = vpop.f32.mrf.mxu0
        %v605 = vadd.f32 0.0, %v604
        %606 = vdwg.mxu0
        %v607 = vld [vmem:[%s2] sm:$0x3]
        %v609 = vlaneseq
        %v610 = vshrl.u32 %v609, 7
        %v611 = vsub.s32 0, %v610
        %v612 = vrot.slane %v607, %v611
        %v613 = vlaneseq
        %v614 = vshrl.u32 %v613, 7
        %v615 = vsub.s32 1, %v614
        %v616 = vrot.slane %v607, %v615
        %v619 = vmul.f32 %v603, %v612
        %v620 = vmul.f32 %v605, %v616
        %v621 = vld [vmem:[%s6] sm:$0xff]
        %623 = vset.pattern.permute.xlu0 0
        %624 = vperm.xlu0 %623, %v621
        %v625 = vpop.permute.xlu0 %624
        %v627 = vadd.f32 %v619, %v625
        %v628 = vadd.f32 %v620, %v625
        %v629 = vadd.f32 %v627, 3.0
        %v630 = vadd.f32 %v628, 3.0
        %v631 = vmax.f32 %v629, 0.0
        %v632 = vmax.f32 %v630, 0.0
        %v633 = vmin.f32 %v631, 6.0
        %v634 = vmin.f32 %v632, 6.0
        %v635 = vmul.f32 %v627, %v633
        %v636 = vmul.f32 %v628, %v634
        %v637 = vmul.f32 %v635, 0.16666667
        %v638 = vmul.f32 %v636, 0.16666667
        %v639 = vld [vmem:[%s7] sm:$0xf]
        %v640 = vld [vmem:[%s8] sm:$0xf]
        %642 = vset.pattern.permute.xlu0 0
        %643 = vperm.xlu0 %642, %v640
        %v644 = vpop.permute.xlu0 %643
        %vm646 = vcmask 64512
        %v648 = vsel %vm646, %v639, 0
        %650 = vmatprep.subr.mxu0 0.0
        %651 = vmatpush1.msra.mxu0 0.0
        %652 = vmatprep.subr.mxu0 0.0
        %653 = vmatpush1.msra.mxu0 0.0
        %654 = vmatprep.subr.mxu0 0.0
        %655 = vmatpush1.msra.mxu0 0.0
        %656 = vmatprep.subr.mxu0 0.0
        %657 = vmatpush1.msra.mxu0 0.0
        %658 = vmatprep.subr.mxu0 0.0
        %659 = vmatpush1.msra.mxu0 0.0
        %660 = vmatprep.subr.mxu0 0.0
        %661 = vmatpush1.msra.mxu0 0.0
        %662 = vmatprep.subr.mxu0 0.0
        %663 = vmatpush1.msra.mxu0 0.0
        %664 = vmatprep.subr.mxu0 0.0
        %665 = vmatpush1.msra.mxu0 0.0
        %666 = vmatprep.subr.mxu0 0.0
        %667 = vmatpush1.msra.mxu0 0.0
        %668 = vmatprep.subr.mxu0 0.0
        %669 = vmatpush1.msra.mxu0 0.0
        %670 = vmatprep.subr.mxu0 0.0
        %671 = vmatpush1.msra.mxu0 0.0
        %672 = vmatprep.subr.mxu0 0.0
        %673 = vmatpush1.msra.mxu0 0.0
        %674 = vmatprep.subr.mxu0 0.0
        %675 = vmatpush1.msra.mxu0 0.0
        %676 = vmatprep.subr.mxu0 0.0
        %677 = vmatpush1.msra.mxu0 0.0
        %678 = vmatprep.subr.mxu0 0.0
        %679 = vmatpush1.msra.mxu0 0.0
        %680 = vmatprep.subr.mxu0 0.0
        %681 = vmatpush1.msra.mxu0 %v637
        %682 = vmatprep.subr.mxu0 0.0
        %683 = vmatpush2.msra.mxu0 0.0
        %684 = vmatprep.subr.mxu0 0.0
        %685 = vmatpush2.msra.mxu0 0.0
        %686 = vmatprep.subr.mxu0 0.0
        %687 = vmatpush2.msra.mxu0 0.0
        %688 = vmatprep.subr.mxu0 0.0
        %689 = vmatpush2.msra.mxu0 0.0
        %690 = vmatprep.subr.mxu0 0.0
        %691 = vmatpush2.msra.mxu0 0.0
        %692 = vmatprep.subr.mxu0 0.0
        %693 = vmatpush2.msra.mxu0 0.0
        %694 = vmatprep.subr.mxu0 0.0
        %695 = vmatpush2.msra.mxu0 0.0
        %696 = vmatprep.subr.mxu0 0.0
        %697 = vmatpush2.msra.mxu0 0.0
        %698 = vmatprep.subr.mxu0 0.0
        %699 = vmatpush2.msra.mxu0 0.0
        %700 = vmatprep.subr.mxu0 0.0
        %701 = vmatpush2.msra.mxu0 0.0
        %702 = vmatprep.subr.mxu0 0.0
        %703 = vmatpush2.msra.mxu0 0.0
        %704 = vmatprep.subr.mxu0 0.0
        %705 = vmatpush2.msra.mxu0 0.0
        %706 = vmatprep.subr.mxu0 0.0
        %707 = vmatpush2.msra.mxu0 0.0
        %708 = vmatprep.subr.mxu0 0.0
        %709 = vmatpush2.msra.mxu0 0.0
        %710 = vmatprep.subr.mxu0 0.0
        %711 = vmatpush2.msra.mxu0 0.0
        %712 = vmatprep.subr.mxu0 0.0
        %713 = vmatpush2.msra.mxu0 0.0
        %714 = vmatprep.mubr.f32.mxu0 0.0
        %715 = vmatmul.mubr.f32.gmra.mxu0 %v648
        %v716 = vpop.f32.mrf.mxu0
        %v717 = vadd.f32 %v644, %v716
        %v718 = vpop.f32.mrf.mxu0
        %719 = vdwg.mxu0
        %v720 = vxor.u32 %v717, 2147483648
        %v721 = vmul.f32 %v720, 1.442695
        %v722 = vpow.pop %v721
        %v723 = vadd.f32 %v722, 1.0
        %v724 = vrcp.pop %v723
        %v725 = vmul.f32 1.0, %v724
        %v726 = vld [vmem:[%s9] sm:$0xf]
        %v727 = vld [vmem:[%s10] sm:$0xf]
        %729 = vset.pattern.permute.xlu0 0
        %730 = vperm.xlu0 %729, %v727
        %v731 = vpop.permute.xlu0 %730
        %v734 = vsel %vm646, %v726, 0
        %736 = vmatprep.subr.mxu0 0.0
        %737 = vmatpush1.msra.mxu0 0.0
        %738 = vmatprep.subr.mxu0 0.0
        %739 = vmatpush1.msra.mxu0 0.0
        %740 = vmatprep.subr.mxu0 0.0
        %741 = vmatpush1.msra.mxu0 0.0
        %742 = vmatprep.subr.mxu0 0.0
        %743 = vmatpush1.msra.mxu0 0.0
        %744 = vmatprep.subr.mxu0 0.0
        %745 = vmatpush1.msra.mxu0 0.0
        %746 = vmatprep.subr.mxu0 0.0
        %747 = vmatpush1.msra.mxu0 0.0
        %748 = vmatprep.subr.mxu0 0.0
        %749 = vmatpush1.msra.mxu0 0.0
        %750 = vmatprep.subr.mxu0 0.0
        %751 = vmatpush1.msra.mxu0 0.0
        %752 = vmatprep.subr.mxu0 0.0
        %753 = vmatpush1.msra.mxu0 0.0
        %754 = vmatprep.subr.mxu0 0.0
        %755 = vmatpush1.msra.mxu0 0.0
        %756 = vmatprep.subr.mxu0 0.0
        %757 = vmatpush1.msra.mxu0 0.0
        %758 = vmatprep.subr.mxu0 0.0
        %759 = vmatpush1.msra.mxu0 0.0
        %760 = vmatprep.subr.mxu0 0.0
        %761 = vmatpush1.msra.mxu0 0.0
        %762 = vmatprep.subr.mxu0 0.0
        %763 = vmatpush1.msra.mxu0 0.0
        %764 = vmatprep.subr.mxu0 0.0
        %765 = vmatpush1.msra.mxu0 0.0
        %766 = vmatprep.subr.mxu0 0.0
        %767 = vmatpush1.msra.mxu0 %v638
        %768 = vmatprep.subr.mxu0 0.0
        %769 = vmatpush2.msra.mxu0 0.0
        %770 = vmatprep.subr.mxu0 0.0
        %771 = vmatpush2.msra.mxu0 0.0
        %772 = vmatprep.subr.mxu0 0.0
        %773 = vmatpush2.msra.mxu0 0.0
        %774 = vmatprep.subr.mxu0 0.0
        %775 = vmatpush2.msra.mxu0 0.0
        %776 = vmatprep.subr.mxu0 0.0
        %777 = vmatpush2.msra.mxu0 0.0
        %778 = vmatprep.subr.mxu0 0.0
        %779 = vmatpush2.msra.mxu0 0.0
        %780 = vmatprep.subr.mxu0 0.0
        %781 = vmatpush2.msra.mxu0 0.0
        %782 = vmatprep.subr.mxu0 0.0
        %783 = vmatpush2.msra.mxu0 0.0
        %784 = vmatprep.subr.mxu0 0.0
        %785 = vmatpush2.msra.mxu0 0.0
        %786 = vmatprep.subr.mxu0 0.0
        %787 = vmatpush2.msra.mxu0 0.0
        %788 = vmatprep.subr.mxu0 0.0
        %789 = vmatpush2.msra.mxu0 0.0
        %790 = vmatprep.subr.mxu0 0.0
        %791 = vmatpush2.msra.mxu0 0.0
        %792 = vmatprep.subr.mxu0 0.0
        %793 = vmatpush2.msra.mxu0 0.0
        %794 = vmatprep.subr.mxu0 0.0
        %795 = vmatpush2.msra.mxu0 0.0
        %796 = vmatprep.subr.mxu0 0.0
        %797 = vmatpush2.msra.mxu0 0.0
        %798 = vmatprep.subr.mxu0 0.0
        %799 = vmatpush2.msra.mxu0 0.0
        %800 = vmatprep.mubr.f32.mxu0 0.0
        %801 = vmatmul.mubr.f32.gmra.mxu0 %v734
        %v802 = vpop.f32.mrf.mxu0
        %v803 = vadd.f32 %v731, %v802
        %v804 = vpop.f32.mrf.mxu0
        %805 = vdwg.mxu0
        %v806 = vxor.u32 %v803, 2147483648
        %v807 = vmul.f32 %v806, 1.442695
        %v808 = vpow.pop %v807
        %v809 = vadd.f32 %v808, 1.0
        %v810 = vrcp.pop %v809
        %v811 = vmul.f32 1.0, %v810
        %v812 = vld [vmem:[%s3] sm:$0xff]
        %v813 = vld [vmem:[%s3 + $0x8] sm:$0xff]
        %v814 = vld [vmem:[%s3 + $0x10] sm:$0xff]
        %v815 = vld [vmem:[%s3 + $0x18] sm:$0xff]
        %vm816 = vcmask 130048
        %v818 = vsel %vm816, %v725, 0
        %820 = vmatprep.subr.mxu0 0.0
        %821 = vmatpush1.msra.mxu0 0.0
        %822 = vmatprep.subr.mxu0 0.0
        %823 = vmatpush1.msra.mxu0 0.0
        %824 = vmatprep.subr.mxu0 0.0
        %825 = vmatpush1.msra.mxu0 0.0
        %826 = vmatprep.subr.mxu0 0.0
        %827 = vmatpush1.msra.mxu0 0.0
        %828 = vmatprep.subr.mxu0 0.0
        %829 = vmatpush1.msra.mxu0 0.0
        %830 = vmatprep.subr.mxu0 0.0
        %831 = vmatpush1.msra.mxu0 0.0
        %832 = vmatprep.subr.mxu0 0.0
        %833 = vmatpush1.msra.mxu0 0.0
        %834 = vmatprep.subr.mxu0 0.0
        %835 = vmatpush1.msra.mxu0 0.0
        %836 = vmatprep.subr.mxu0 0.0
        %837 = vmatpush1.msra.mxu0 0.0
        %838 = vmatprep.subr.mxu0 0.0
        %839 = vmatpush1.msra.mxu0 0.0
        %840 = vmatprep.subr.mxu0 0.0
        %841 = vmatpush1.msra.mxu0 0.0
        %842 = vmatprep.subr.mxu0 0.0
        %843 = vmatpush1.msra.mxu0 0.0
        %844 = vmatprep.subr.mxu0 0.0
        %845 = vmatpush1.msra.mxu0 0.0
        %846 = vmatprep.subr.mxu0 0.0
        %847 = vmatpush1.msra.mxu0 0.0
        %848 = vmatprep.subr.mxu0 %v815
        %849 = vmatpush1.msra.mxu0 %v814
        %850 = vmatprep.subr.mxu0 %v813
        %851 = vmatpush1.msra.mxu0 %v812
        %852 = vmatprep.subr.mxu0 0.0
        %853 = vmatpush2.msra.mxu0 0.0
        %854 = vmatprep.subr.mxu0 0.0
        %855 = vmatpush2.msra.mxu0 0.0
        %856 = vmatprep.subr.mxu0 0.0
        %857 = vmatpush2.msra.mxu0 0.0
        %858 = vmatprep.subr.mxu0 0.0
        %859 = vmatpush2.msra.mxu0 0.0
        %860 = vmatprep.subr.mxu0 0.0
        %861 = vmatpush2.msra.mxu0 0.0
        %862 = vmatprep.subr.mxu0 0.0
        %863 = vmatpush2.msra.mxu0 0.0
        %864 = vmatprep.subr.mxu0 0.0
        %865 = vmatpush2.msra.mxu0 0.0
        %866 = vmatprep.subr.mxu0 0.0
        %867 = vmatpush2.msra.mxu0 0.0
        %868 = vmatprep.subr.mxu0 0.0
        %869 = vmatpush2.msra.mxu0 0.0
        %870 = vmatprep.subr.mxu0 0.0
        %871 = vmatpush2.msra.mxu0 0.0
        %872 = vmatprep.subr.mxu0 0.0
        %873 = vmatpush2.msra.mxu0 0.0
        %874 = vmatprep.subr.mxu0 0.0
        %875 = vmatpush2.msra.mxu0 0.0
        %876 = vmatprep.subr.mxu0 0.0
        %877 = vmatpush2.msra.mxu0 0.0
        %878 = vmatprep.subr.mxu0 0.0
        %879 = vmatpush2.msra.mxu0 0.0
        %880 = vmatprep.subr.mxu0 0.0
        %881 = vmatpush2.msra.mxu0 0.0
        %882 = vmatprep.subr.mxu0 0.0
        %883 = vmatpush2.msra.mxu0 0.0
        %884 = vmatprep.mubr.f32.mxu0 0.0
        %885 = vmatmul.mubr.f32.gmra.mxu0 %v818
        %v886 = vpop.f32.mrf.mxu0
        %v887 = vadd.f32 0.0, %v886
        %v888 = vpop.f32.mrf.mxu0
        %v889 = vadd.f32 0.0, %v888
        %890 = vdwg.mxu0
        %v891 = vld [vmem:[%s4] sm:$0xff]
        %v892 = vld [vmem:[%s4 + $0x8] sm:$0xff]
        %v893 = vld [vmem:[%s4 + $0x10] sm:$0xff]
        %v894 = vld [vmem:[%s4 + $0x18] sm:$0xff]
        %v896 = vsel %vm816, %v811, 0
        %898 = vmatprep.subr.mxu0 0.0
        %899 = vmatpush1.msra.mxu0 0.0
        %900 = vmatprep.subr.mxu0 0.0
        %901 = vmatpush1.msra.mxu0 0.0
        %902 = vmatprep.subr.mxu0 0.0
        %903 = vmatpush1.msra.mxu0 0.0
        %904 = vmatprep.subr.mxu0 0.0
        %905 = vmatpush1.msra.mxu0 0.0
        %906 = vmatprep.subr.mxu0 0.0
        %907 = vmatpush1.msra.mxu0 0.0
        %908 = vmatprep.subr.mxu0 0.0
        %909 = vmatpush1.msra.mxu0 0.0
        %910 = vmatprep.subr.mxu0 0.0
        %911 = vmatpush1.msra.mxu0 0.0
        %912 = vmatprep.subr.mxu0 0.0
        %913 = vmatpush1.msra.mxu0 0.0
        %914 = vmatprep.subr.mxu0 0.0
        %915 = vmatpush1.msra.mxu0 0.0
        %916 = vmatprep.subr.mxu0 0.0
        %917 = vmatpush1.msra.mxu0 0.0
        %918 = vmatprep.subr.mxu0 0.0
        %919 = vmatpush1.msra.mxu0 0.0
        %920 = vmatprep.subr.mxu0 0.0
        %921 = vmatpush1.msra.mxu0 0.0
        %922 = vmatprep.subr.mxu0 0.0
        %923 = vmatpush1.msra.mxu0 0.0
        %924 = vmatprep.subr.mxu0 0.0
        %925 = vmatpush1.msra.mxu0 0.0
        %926 = vmatprep.subr.mxu0 %v894
        %927 = vmatpush1.msra.mxu0 %v893
        %928 = vmatprep.subr.mxu0 %v892
        %929 = vmatpush1.msra.mxu0 %v891
        %930 = vmatprep.subr.mxu0 0.0
        %931 = vmatpush2.msra.mxu0 0.0
        %932 = vmatprep.subr.mxu0 0.0
        %933 = vmatpush2.msra.mxu0 0.0
        %934 = vmatprep.subr.mxu0 0.0
        %935 = vmatpush2.msra.mxu0 0.0
        %936 = vmatprep.subr.mxu0 0.0
        %937 = vmatpush2.msra.mxu0 0.0
        %938 = vmatprep.subr.mxu0 0.0
        %939 = vmatpush2.msra.mxu0 0.0
        %940 = vmatprep.subr.mxu0 0.0
        %941 = vmatpush2.msra.mxu0 0.0
        %942 = vmatprep.subr.mxu0 0.0
        %943 = vmatpush2.msra.mxu0 0.0
        %944 = vmatprep.subr.mxu0 0.0
        %945 = vmatpush2.msra.mxu0 0.0
        %946 = vmatprep.subr.mxu0 0.0
        %947 = vmatpush2.msra.mxu0 0.0
        %948 = vmatprep.subr.mxu0 0.0
        %949 = vmatpush2.msra.mxu0 0.0
        %950 = vmatprep.subr.mxu0 0.0
        %951 = vmatpush2.msra.mxu0 0.0
        %952 = vmatprep.subr.mxu0 0.0
        %953 = vmatpush2.msra.mxu0 0.0
        %954 = vmatprep.subr.mxu0 0.0
        %955 = vmatpush2.msra.mxu0 0.0
        %956 = vmatprep.subr.mxu0 0.0
        %957 = vmatpush2.msra.mxu0 0.0
        %958 = vmatprep.subr.mxu0 0.0
        %959 = vmatpush2.msra.mxu0 0.0
        %960 = vmatprep.subr.mxu0 0.0
        %961 = vmatpush2.msra.mxu0 0.0
        %962 = vmatprep.mubr.f32.mxu0 0.0
        %963 = vmatmul.mubr.f32.gmra.mxu0 %v896
        %v964 = vpop.f32.mrf.mxu0
        %v965 = vadd.f32 0.0, %v964
        %v966 = vpop.f32.mrf.mxu0
        %v967 = vadd.f32 0.0, %v966
        %968 = vdwg.mxu0
        %v969 = vmul.f32 %v887, %v965
        %v970 = vmul.f32 %v889, %v967
        %v973 = vcombine.low %v969, %v970
        %v975 = vmul.f32 %v385, %v973
        %976 = vst [vmem:[%s379] sm:$0xff] %v975
        %s977 = sand.u32 %s269, 1
        %s978 = scalar_lea.sflag [#allocation3], %s977
        %s979 = sand.u32 %s269, 1
        %s980 = smul.addr %s979, 8
        %s981 = scalar_lea.vmem [#allocation2], %s980
        // Predicated region
        $region65: #{tpu_custom_call.1} parent=63 // pred_check
          %p982 = pneg %p279
        $region66: #{tpu_custom_call.1} parent=63 // pred_check_branch
          %984 = sbr.rel (%p982) target = $region68
        $region67: #{tpu_custom_call.1} parent=63 // pred_region
          %s986 = ssub.s32 128, 128
          %987 = vsyncadd %s978, %s986
          %s988 = smul.addr %s25, 2
          %s989 = smul.addr %s988, 64
          %s990 = scalar_lea.hbm %s11, %s989
          %s992 = sshll.u32 %s981, 4
          %s993 = int_to_ptr.vmem [resolvable:$true] %s992
          %995 = dma.vmem_to_hbm [thread:$0]  %s993, 128, %s990, %s978
        $region68: #{tpu_custom_call.1} parent=63 // pred_fallthru
          _
      $region64: #{tpu_custom_call.1} parent=5 // pred_fallthru
        _
      %p996 = scmp.le.s32.totalorder 2, %s20
      // Predicated region
      $region69: #{tpu_custom_call.1} parent=5 // pred_check
        %p997 = pneg %p996
      $region70: #{tpu_custom_call.1} parent=5 // pred_check_branch
        %999 = sbr.rel (%p997) target = $region72
      $region71: #{tpu_custom_call.1} parent=5 // pred_region
        %s1000 = ssub.s32 %s20, 2
        // Predicated region
        $region73: #{tpu_custom_call.1} parent=71 // pred_check
          %p1001 = pneg %p285
        $region74: #{tpu_custom_call.1} parent=71 // pred_check_branch
          %1003 = sbr.rel (%p1001) target = $region76
        $region75: #{tpu_custom_call.1} parent=71 // pred_region
          %s1004 = sand.u32 %s270, 1
          %s1005 = scalar_lea.sflag [#allocation3], %s1004
          %s1006 = sand.u32 %s270, 1
          %s1007 = smul.addr %s1006, 8
          %s1008 = scalar_lea.vmem [#allocation2], %s1007
          %1009 = dma.done %s1005, 128
        $region76: #{tpu_custom_call.1} parent=71 // pred_fallthru
          _
      $region72: #{tpu_custom_call.1} parent=5 // pred_fallthru
        _
    $region6: #{tpu_custom_call.1} parent=1 // loop_footer
      %s24 = sadd.s32 1, %s20
    $region7: #{tpu_custom_call.1} parent=1 // loop_footer_branch
      %19 = sbr.rel target = $region3
    $region8: #{tpu_custom_call.1} parent=1 // loop_exit
      _
    %1010 = vsyncpa [#allocation3], 1
    %s1011 = scalar_lea.sflag [#allocation3], 1
    %1012 = vsyncpa %s1011, 1

// kernel: tpu_custom_call.1
$region0: #{tpu_custom_call.1}
  #allocation0 [shape = 'u32[]', space=smem, size = 0x4, offset = 0x4, fixed_abs, tag = 'smem constant byte address 0x4 - core index']
  #allocation1 [shape = 'u32[144,128]{1,0:T(1,128)}', space=vmem, size = 0x12000, scoped, tag = 'internal scratch']
  %s0 = inlined_call_operand.vmem [shape: f32[2,4,256], index: 0, kind: input, shape index: {}]
  %s1 = inlined_call_operand.vmem [shape: f32[256,144], index: 1, kind: input, shape index: {}]
  %s2 = inlined_call_operand.vmem [shape: f32[1,144], index: 2, kind: input, shape index: {}]
  %s3 = inlined_call_operand.vmem [shape: f32[16,256], index: 3, kind: input, shape index: {}]
  %s4 = inlined_call_operand.vmem [shape: f32[16,256], index: 4, kind: input, shape index: {}]
  %s5 = inlined_call_operand.vmem [shape: f32[8,4], index: 5, kind: input, shape index: {}]
  %s6 = inlined_call_operand.vmem [shape: f32[8,1], index: 6, kind: input, shape index: {}]
  %s7 = inlined_call_operand.vmem [shape: f32[4,8], index: 7, kind: input, shape index: {}]
  %s8 = inlined_call_operand.vmem [shape: f32[4,1], index: 8, kind: input, shape index: {}]
  %s9 = inlined_call_operand.vmem [shape: f32[4,8], index: 9, kind: input, shape index: {}]
  %s10 = inlined_call_operand.vmem [shape: f32[4,1], index: 10, kind: input, shape index: {}]
  %s11 = inlined_call_operand.hbm [shape: f32[2,4,256], index: 11, kind: output, shape index: {}]
  %s12 = sld [smem:[#allocation0]]
  $region77: #{tpu_custom_call.1} parent=0
    _
  %s14 = ssub.s32 1, %s12
  %s15 = scalar_select 0, %s14, %s12
  $region1: #{tpu_custom_call.1} parent=0
    #allocation2 [shape = 'u8[8192]{0}', space=vmem, size = 0x2000, scoped, tag = 'output window, operand 0']
    #allocation3 [shape = 's32[2]{0}', space=sflag, size = 0x8, scoped, tag = 'scoped memory for tpu_custom_call.1']
    %16 = vsyncpa [#allocation3], 0
    %s17 = scalar_lea.sflag [#allocation3], 1
    %18 = vsyncpa %s17, 0
    loop: start=0, step=1, limit=4
    $region2: #{tpu_custom_call.1} parent=1 // loop_pre_header
      _
    $region3: #{tpu_custom_call.1} parent=1 // loop_header
      %s20 = sphi 0, %s24
      %p21 = scmp.ge.s32.totalorder %s20, 4
      %s30 = sphi 0, %s32
      %s33 = sphi 0, %s30
      %s34 = sphi 0, %s33
      %s50 = sphi 0, %s34
      %s54 = sphi 0, %s54
      %s56 = sphi 0, %s54
      %s57 = sphi 0, %s56
      %s71 = sphi 0, %s57
      %s75 = sphi 0, %s75
      %s77 = sphi 0, %s75
      %s78 = sphi 0, %s77
      %s92 = sphi 0, %s78
      %s96 = sphi 0, %s96
      %s98 = sphi 0, %s96
      %s99 = sphi 0, %s98
      %s113 = sphi 0, %s99
      %s117 = sphi 0, %s117
      %s119 = sphi 0, %s117
      %s120 = sphi 0, %s119
      %s134 = sphi 0, %s120
      %s138 = sphi 0, %s138
      %s140 = sphi 0, %s138
      %s141 = sphi 0, %s140
      %s155 = sphi 0, %s141
      %s159 = sphi 0, %s159
      %s161 = sphi 0, %s159
      %s162 = sphi 0, %s161
      %s176 = sphi 0, %s162
      %s180 = sphi 0, %s180
      %s182 = sphi 0, %s180
      %s183 = sphi 0, %s182
      %s197 = sphi 0, %s183
      %s201 = sphi 0, %s201
      %s203 = sphi 0, %s201
      %s204 = sphi 0, %s203
      %s218 = sphi 0, %s204
      %s222 = sphi 0, %s222
      %s224 = sphi 0, %s222
      %s225 = sphi 0, %s224
      %s239 = sphi 0, %s225
      %s243 = sphi 0, %s243
      %s245 = sphi 0, %s243
      %s246 = sphi 0, %s245
      %s260 = sphi 0, %s246
      %s266 = sphi 0, %s268
      %s269 = sphi 0, %s266
      %s270 = sphi 0, %s269
      %s286 = sphi 0, %s270
    $region4: #{tpu_custom_call.1} parent=1 // loop_header_branch
      %23 = sbr.rel (%p21) target = $region8
    $region5: #{tpu_custom_call.1} parent=1 // loop_body
      %s25 = ssub.s32 %s20, 1
      %s26 = ssub.s32 %s20, 2
      %s27 = sadd.s32 %s20, 1
      %s28 = ssub.s32 %s20, %s27
      %p29 = scmp.eq.s32.totalorder %s28, 0
      %s31 = sadd.s32 %s30, 1
      %s32 = scalar_select %p29, %s30, %s31
      %p35 = pneg %p29
      %p36 = scmp.eq.s32.totalorder %s20, 1
      %p37 = por %p35, %p36
      %p38 = scmp.ne.s32.totalorder %s30, %s33
      %p39 = scmp.eq.s32.totalorder %s20, 0
      %p40 = por %p38, %p39
      %p41 = scmp.ne.s32.totalorder %s30, %s33
      %p42 = scmp.eq.s32.totalorder %s25, 1
      %p43 = por %p41, %p42
      %p44 = scmp.ne.s32.totalorder %s33, %s34
      %p45 = scmp.eq.s32.totalorder %s25, 0
      %p46 = por %p44, %p45
      %p47 = scmp.ne.s32.totalorder %s33, %s34
      %p48 = scmp.eq.s32.totalorder %s26, 1
      %p49 = por %p47, %p48
      %p51 = scmp.ne.s32.totalorder %s34, %s50
      %p52 = scmp.eq.s32.totalorder %s26, 0
      %p53 = por %p51, %p52
      %s55 = sadd.s32 %s54, 1
      %p58 = scmp.eq.s32.totalorder %s20, 1
      %p59 = scmp.ne.s32.totalorder %s54, %s56
      %p60 = scmp.eq.s32.totalorder %s20, 0
      %p61 = por %p59, %p60
      %p62 = scmp.ne.s32.totalorder %s54, %s56
      %p63 = scmp.eq.s32.totalorder %s25, 1
      %p64 = por %p62, %p63
      %p65 = scmp.ne.s32.totalorder %s56, %s57
      %p66 = scmp.eq.s32.totalorder %s25, 0
      %p67 = por %p65, %p66
      %p68 = scmp.ne.s32.totalorder %s56, %s57
      %p69 = scmp.eq.s32.totalorder %s26, 1
      %p70 = por %p68, %p69
      %p72 = scmp.ne.s32.totalorder %s57, %s71
      %p73 = scmp.eq.s32.totalorder %s26, 0
      %p74 = por %p72, %p73
      %s76 = sadd.s32 %s75, 1
      %p79 = scmp.eq.s32.totalorder %s20, 1
      %p80 = scmp.ne.s32.totalorder %s75, %s77
      %p81 = scmp.eq.s32.totalorder %s20, 0
      %p82 = por %p80, %p81
      %p83 = scmp.ne.s32.totalorder %s75, %s77
      %p84 = scmp.eq.s32.totalorder %s25, 1
      %p85 = por %p83, %p84
      %p86 = scmp.ne.s32.totalorder %s77, %s78
      %p87 = scmp.eq.s32.totalorder %s25, 0
      %p88 = por %p86, %p87
      %p89 = scmp.ne.s32.totalorder %s77, %s78
      %p90 = scmp.eq.s32.totalorder %s26, 1
      %p91 = por %p89, %p90
      %p93 = scmp.ne.s32.totalorder %s78, %s92
      %p94 = scmp.eq.s32.totalorder %s26, 0
      %p95 = por %p93, %p94
      %s97 = sadd.s32 %s96, 1
      %p100 = scmp.eq.s32.totalorder %s20, 1
      %p101 = scmp.ne.s32.totalorder %s96, %s98
      %p102 = scmp.eq.s32.totalorder %s20, 0
      %p103 = por %p101, %p102
      %p104 = scmp.ne.s32.totalorder %s96, %s98
      %p105 = scmp.eq.s32.totalorder %s25, 1
      %p106 = por %p104, %p105
      %p107 = scmp.ne.s32.totalorder %s98, %s99
      %p108 = scmp.eq.s32.totalorder %s25, 0
      %p109 = por %p107, %p108
      %p110 = scmp.ne.s32.totalorder %s98, %s99
      %p111 = scmp.eq.s32.totalorder %s26, 1
      %p112 = por %p110, %p111
      %p114 = scmp.ne.s32.totalorder %s99, %s113
      %p115 = scmp.eq.s32.totalorder %s26, 0
      %p116 = por %p114, %p115
      %s118 = sadd.s32 %s117, 1
      %p121 = scmp.eq.s32.totalorder %s20, 1
      %p122 = scmp.ne.s32.totalorder %s117, %s119
      %p123 = scmp.eq.s32.totalorder %s20, 0
      %p124 = por %p122, %p123
      %p125 = scmp.ne.s32.totalorder %s117, %s119
      %p126 = scmp.eq.s32.totalorder %s25, 1
      %p127 = por %p125, %p126
      %p128 = scmp.ne.s32.totalorder %s119, %s120
      %p129 = scmp.eq.s32.totalorder %s25, 0
      %p130 = por %p128, %p129
      %p131 = scmp.ne.s32.totalorder %s119, %s120
      %p132 = scmp.eq.s32.totalorder %s26, 1
      %p133 = por %p131, %p132
      %p135 = scmp.ne.s32.totalorder %s120, %s134
      %p136 = scmp.eq.s32.totalorder %s26, 0
      %p137 = por %p135, %p136
      %s139 = sadd.s32 %s138, 1
      %p142 = scmp.eq.s32.totalorder %s20, 1
      %p143 = scmp.ne.s32.totalorder %s138, %s140
      %p144 = scmp.eq.s32.totalorder %s20, 0
      %p145 = por %p143, %p144
      %p146 = scmp.ne.s32.totalorder %s138, %s140
      %p147 = scmp.eq.s32.totalorder %s25, 1
      %p148 = por %p146, %p147
      %p149 = scmp.ne.s32.totalorder %s140, %s141
      %p150 = scmp.eq.s32.totalorder %s25, 0
      %p151 = por %p149, %p150
      %p152 = scmp.ne.s32.totalorder %s140, %s141
      %p153 = scmp.eq.s32.totalorder %s26, 1
      %p154 = por %p152, %p153
      %p156 = scmp.ne.s32.totalorder %s141, %s155
      %p157 = scmp.eq.s32.totalorder %s26, 0
      %p158 = por %p156, %p157
      %s160 = sadd.s32 %s159, 1
      %p163 = scmp.eq.s32.totalorder %s20, 1
      %p164 = scmp.ne.s32.totalorder %s159, %s161
      %p165 = scmp.eq.s32.totalorder %s20, 0
      %p166 = por %p164, %p165
      %p167 = scmp.ne.s32.totalorder %s159, %s161
      %p168 = scmp.eq.s32.totalorder %s25, 1
      %p169 = por %p167, %p168
      %p170 = scmp.ne.s32.totalorder %s161, %s162
      %p171 = scmp.eq.s32.totalorder %s25, 0
      %p172 = por %p170, %p171
      %p173 = scmp.ne.s32.totalorder %s161, %s162
      %p174 = scmp.eq.s32.totalorder %s26, 1
      %p175 = por %p173, %p174
      %p177 = scmp.ne.s32.totalorder %s162, %s176
      %p178 = scmp.eq.s32.totalorder %s26, 0
      %p179 = por %p177, %p178
      %s181 = sadd.s32 %s180, 1
      %p184 = scmp.eq.s32.totalorder %s20, 1
      %p185 = scmp.ne.s32.totalorder %s180, %s182
      %p186 = scmp.eq.s32.totalorder %s20, 0
      %p187 = por %p185, %p186
      %p188 = scmp.ne.s32.totalorder %s180, %s182
      %p189 = scmp.eq.s32.totalorder %s25, 1
      %p190 = por %p188, %p189
      %p191 = scmp.ne.s32.totalorder %s182, %s183
      %p192 = scmp.eq.s32.totalorder %s25, 0
      %p193 = por %p191, %p192
      %p194 = scmp.ne.s32.totalorder %s182, %s183
      %p195 = scmp.eq.s32.totalorder %s26, 1
      %p196 = por %p194, %p195
      %p198 = scmp.ne.s32.totalorder %s183, %s197
      %p199 = scmp.eq.s32.totalorder %s26, 0
      %p200 = por %p198, %p199
      %s202 = sadd.s32 %s201, 1
      %p205 = scmp.eq.s32.totalorder %s20, 1
      %p206 = scmp.ne.s32.totalorder %s201, %s203
      %p207 = scmp.eq.s32.totalorder %s20, 0
      %p208 = por %p206, %p207
      %p209 = scmp.ne.s32.totalorder %s201, %s203
      %p210 = scmp.eq.s32.totalorder %s25, 1
      %p211 = por %p209, %p210
      %p212 = scmp.ne.s32.totalorder %s203, %s204
      %p213 = scmp.eq.s32.totalorder %s25, 0
      %p214 = por %p212, %p213
      %p215 = scmp.ne.s32.totalorder %s203, %s204
      %p216 = scmp.eq.s32.totalorder %s26, 1
      %p217 = por %p215, %p216
      %p219 = scmp.ne.s32.totalorder %s204, %s218
      %p220 = scmp.eq.s32.totalorder %s26, 0
      %p221 = por %p219, %p220
      %s223 = sadd.s32 %s222, 1
      %p226 = scmp.eq.s32.totalorder %s20, 1
      %p227 = scmp.ne.s32.totalorder %s222, %s224
      %p228 = scmp.eq.s32.totalorder %s20, 0
      %p229 = por %p227, %p228
      %p230 = scmp.ne.s32.totalorder %s222, %s224
      %p231 = scmp.eq.s32.totalorder %s25, 1
      %p232 = por %p230, %p231
      %p233 = scmp.ne.s32.totalorder %s224, %s225
      %p234 = scmp.eq.s32.totalorder %s25, 0
      %p235 = por %p233, %p234
      %p236 = scmp.ne.s32.totalorder %s224, %s225
      %p237 = scmp.eq.s32.totalorder %s26, 1
      %p238 = por %p236, %p237
      %p240 = scmp.ne.s32.totalorder %s225, %s239
      %p241 = scmp.eq.s32.totalorder %s26, 0
      %p242 = por %p240, %p241
      %s244 = sadd.s32 %s243, 1
      %p247 = scmp.eq.s32.totalorder %s20, 1
      %p248 = scmp.ne.s32.totalorder %s243, %s245
      %p249 = scmp.eq.s32.totalorder %s20, 0
      %p250 = por %p248, %p249
      %p251 = scmp.ne.s32.totalorder %s243, %s245
      %p252 = scmp.eq.s32.totalorder %s25, 1
      %p253 = por %p251, %p252
      %p254 = scmp.ne.s32.totalorder %s245, %s246
      %p255 = scmp.eq.s32.totalorder %s25, 0
      %p256 = por %p254, %p255
      %p257 = scmp.ne.s32.totalorder %s245, %s246
      %p258 = scmp.eq.s32.totalorder %s26, 1
      %p259 = por %p257, %p258
      %p261 = scmp.ne.s32.totalorder %s246, %s260
      %p262 = scmp.eq.s32.totalorder %s26, 0
      %p263 = por %p261, %p262
      %s264 = ssub.s32 %s20, %s27
      %p265 = scmp.eq.s32.totalorder %s264, 0
      %s267 = sadd.s32 %s266, 1
      %s268 = scalar_select %p265, %s266, %s267
      %p271 = pneg %p265
      %p272 = scmp.eq.s32.totalorder %s20, 1
      %p273 = por %p271, %p272
      %p274 = scmp.ne.s32.totalorder %s266, %s269
      %p275 = scmp.eq.s32.totalorder %s20, 0
      %p276 = por %p274, %p275
      %p277 = scmp.ne.s32.totalorder %s266, %s269
      %p278 = scmp.eq.s32.totalorder %s25, 1
      %p279 = por %p277, %p278
      %p280 = scmp.ne.s32.totalorder %s269, %s270
      %p281 = scmp.eq.s32.totalorder %s25, 0
      %p282 = por %p280, %p281
      %p283 = scmp.ne.s32.totalorder %s269, %s270
      %p284 = scmp.eq.s32.totalorder %s26, 1
      %p285 = por %p283, %p284
      %p287 = scmp.ne.s32.totalorder %s270, %s286
      %p288 = scmp.eq.s32.totalorder %s26, 0
      %p289 = por %p287, %p288
      %p290 = scmp.le.s32.totalorder 1, %s20
      %p291 = scmp.lt.s32.totalorder %s20, 3
      %p292 = pnand %p290, %p291
      %p293 = pneg %p292
      // Predicated region
      $region9: #{tpu_custom_call.1} parent=5 // pred_check
        _
      $region10: #{tpu_custom_call.1} parent=5 // pred_check_branch
        %295 = sbr.rel (%p292) target = $region12
      $region11: #{tpu_custom_call.1} parent=5 // pred_region
        %s296 = ssub.s32 %s20, 1
        // Predicated region
        $region13: #{tpu_custom_call.1} parent=11 // pred_check
          %p297 = pneg %p67
        $region14: #{tpu_custom_call.1} parent=11 // pred_check_branch
          %299 = sbr.rel (%p297) target = $region16
        $region15: #{tpu_custom_call.1} parent=11 // pred_region
          _
        $region16: #{tpu_custom_call.1} parent=11 // pred_fallthru
          _
        // Predicated region
        $region17: #{tpu_custom_call.1} parent=11 // pred_check
          %p300 = pneg %p88
        $region18: #{tpu_custom_call.1} parent=11 // pred_check_branch
          %302 = sbr.rel (%p300) target = $region20
        $region19: #{tpu_custom_call.1} parent=11 // pred_region
          _
        $region20: #{tpu_custom_call.1} parent=11 // pred_fallthru
          _
        // Predicated region
        $region21: #{tpu_custom_call.1} parent=11 // pred_check
          %p303 = pneg %p109
        $region22: #{tpu_custom_call.1} parent=11 // pred_check_branch
          %305 = sbr.rel (%p303) target = $region24
        $region23: #{tpu_custom_call.1} parent=11 // pred_region
          _
        $region24: #{tpu_custom_call.1} parent=11 // pred_fallthru
          _
        // Predicated region
        $region25: #{tpu_custom_call.1} parent=11 // pred_check
          %p306 = pneg %p130
        $region26: #{tpu_custom_call.1} parent=11 // pred_check_branch
          %308 = sbr.rel (%p306) target = $region28
        $region27: #{tpu_custom_call.1} parent=11 // pred_region
          _
        $region28: #{tpu_custom_call.1} parent=11 // pred_fallthru
          _
        // Predicated region
        $region29: #{tpu_custom_call.1} parent=11 // pred_check
          %p309 = pneg %p151
        $region30: #{tpu_custom_call.1} parent=11 // pred_check_branch
          %311 = sbr.rel (%p309) target = $region32
        $region31: #{tpu_custom_call.1} parent=11 // pred_region
          _
        $region32: #{tpu_custom_call.1} parent=11 // pred_fallthru
          _
        // Predicated region
        $region33: #{tpu_custom_call.1} parent=11 // pred_check
          %p312 = pneg %p172
        $region34: #{tpu_custom_call.1} parent=11 // pred_check_branch
          %314 = sbr.rel (%p312) target = $region36
        $region35: #{tpu_custom_call.1} parent=11 // pred_region
          _
        $region36: #{tpu_custom_call.1} parent=11 // pred_fallthru
          _
        // Predicated region
        $region37: #{tpu_custom_call.1} parent=11 // pred_check
          %p315 = pneg %p193
        $region38: #{tpu_custom_call.1} parent=11 // pred_check_branch
          %317 = sbr.rel (%p315) target = $region40
        $region39: #{tpu_custom_call.1} parent=11 // pred_region
          _
        $region40: #{tpu_custom_call.1} parent=11 // pred_fallthru
          _
        // Predicated region
        $region41: #{tpu_custom_call.1} parent=11 // pred_check
          %p318 = pneg %p214
        $region42: #{tpu_custom_call.1} parent=11 // pred_check_branch
          %320 = sbr.rel (%p318) target = $region44
        $region43: #{tpu_custom_call.1} parent=11 // pred_region
          _
        $region44: #{tpu_custom_call.1} parent=11 // pred_fallthru
          _
        // Predicated region
        $region45: #{tpu_custom_call.1} parent=11 // pred_check
          %p321 = pneg %p235
        $region46: #{tpu_custom_call.1} parent=11 // pred_check_branch
          %323 = sbr.rel (%p321) target = $region48
        $region47: #{tpu_custom_call.1} parent=11 // pred_region
          _
        $region48: #{tpu_custom_call.1} parent=11 // pred_fallthru
          _
        // Predicated region
        $region49: #{tpu_custom_call.1} parent=11 // pred_check
          %p324 = pneg %p256
        $region50: #{tpu_custom_call.1} parent=11 // pred_check_branch
          %326 = sbr.rel (%p324) target = $region52
        $region51: #{tpu_custom_call.1} parent=11 // pred_region
          _
        $region52: #{tpu_custom_call.1} parent=11 // pred_fallthru
          _
      $region12: #{tpu_custom_call.1} parent=5 // pred_fallthru
        _
      %p327 = scmp.lt.s32.totalorder %s20, 2
      // Predicated region
      $region53: #{tpu_custom_call.1} parent=5 // pred_check
        %p328 = pneg %p327
      $region54: #{tpu_custom_call.1} parent=5 // pred_check_branch
        %330 = sbr.rel (%p328) target = $region56
      $region55: #{tpu_custom_call.1} parent=5 // pred_region
        // Predicated region
        $region57: #{tpu_custom_call.1} parent=55 // pred_check
          %p331 = pneg %p40
        $region58: #{tpu_custom_call.1} parent=55 // pred_check_branch
          %333 = sbr.rel (%p331) target = $region60
        $region59: #{tpu_custom_call.1} parent=55 // pred_region
          %p334 = scmp.lt.s32.totalorder %s20, 1
          %s335 = scalar_select %p334, %s20, 1
          %s336 = smul.addr %s335, 2
          %s337 = smul.addr %s336, 4
          %s338 = scalar_lea.vmem %s0, %s337
        $region60: #{tpu_custom_call.1} parent=55 // pred_fallthru
          _
      $region56: #{tpu_custom_call.1} parent=5 // pred_fallthru
        _
      %p339 = scmp.le.s32.totalorder 1, %s20
      %p340 = scmp.lt.s32.totalorder %s20, 3
      %p341 = pnand %p339, %p340
      %p342 = pneg %p341
      // Predicated region
      $region61: #{tpu_custom_call.1} parent=5 // pred_check
        _
      $region62: #{tpu_custom_call.1} parent=5 // pred_check_branch
        %344 = sbr.rel (%p341) target = $region64
      $region63: #{tpu_custom_call.1} parent=5 // pred_region
        %s345 = ssub.s32 %s20, 1
        %p346 = scmp.lt.s32.totalorder %s25, 1
        %s347 = scalar_select %p346, %s25, 1
        %s348 = smul.addr %s347, 2
        %s349 = smul.addr %s348, 4
        %s350 = scalar_lea.vmem %s0, %s349
        %p351 = pneg %p46
        %p352 = pneg %p43
        %p353 = pneg %p67
        %p354 = pneg %p64
        %p355 = pneg %p88
        %p356 = pneg %p85
        %p357 = pneg %p109
        %p358 = pneg %p106
        %p359 = pneg %p130
        %p360 = pneg %p127
        %p361 = pneg %p151
        %p362 = pneg %p148
        %p363 = pneg %p172
        %p364 = pneg %p169
        %p365 = pneg %p193
        %p366 = pneg %p190
        %p367 = pneg %p214
        %p368 = pneg %p211
        %p369 = pneg %p235
        %p370 = pneg %p232
        %p371 = pneg %p256
        %p372 = pneg %p253
        %p373 = pneg %p282
        %p374 = pneg %p279
        %s375 = sand.u32 %s269, 1
        %s376 = scalar_lea.sflag [#allocation3], %s375
        %s377 = sand.u32 %s269, 1
        %s378 = smul.addr %s377, 8
        %s379 = scalar_lea.vmem [#allocation2], %s378
        %p380 = scmp.lt.s32.totalorder %s25, 1
        %s381 = scalar_select %p380, %s25, 1
        %s382 = smul.addr %s381, 2
        %s383 = smul.addr %s382, 4
        %s384 = scalar_lea.vmem %s0, %s383
        %v385 = vld [vmem:[%s384] sm:$0xff]
        %v386 = vld [vmem:[%s1] sm:$0xff]
        %v387 = vld [vmem:[%s1 + $0x8] sm:$0xff]
        %v388 = vld [vmem:[%s1 + $0x10] sm:$0xff]
        %v389 = vld [vmem:[%s1 + $0x18] sm:$0xff]
        %v390 = vld [vmem:[%s1 + $0x20] sm:$0xff]
        %v391 = vld [vmem:[%s1 + $0x28] sm:$0xff]
        %v392 = vld [vmem:[%s1 + $0x30] sm:$0xff]
        %v393 = vld [vmem:[%s1 + $0x38] sm:$0xff]
        %v394 = vld [vmem:[%s1 + $0x40] sm:$0xff]
        %v395 = vld [vmem:[%s1 + $0x48] sm:$0xff]
        %v396 = vld [vmem:[%s1 + $0x50] sm:$0xff]
        %v397 = vld [vmem:[%s1 + $0x58] sm:$0xff]
        %v398 = vld [vmem:[%s1 + $0x60] sm:$0xff]
        %v399 = vld [vmem:[%s1 + $0x68] sm:$0xff]
        %v400 = vld [vmem:[%s1 + $0x70] sm:$0xff]
        %v401 = vld [vmem:[%s1 + $0x78] sm:$0xff]
        %v402 = vld [vmem:[%s1 + $0x80] sm:$0xff]
        %v403 = vld [vmem:[%s1 + $0x88] sm:$0xff]
        %v404 = vld [vmem:[%s1 + $0x90] sm:$0xff]
        %v405 = vld [vmem:[%s1 + $0x98] sm:$0xff]
        %v406 = vld [vmem:[%s1 + $0xa0] sm:$0xff]
        %v407 = vld [vmem:[%s1 + $0xa8] sm:$0xff]
        %v408 = vld [vmem:[%s1 + $0xb0] sm:$0xff]
        %v409 = vld [vmem:[%s1 + $0xb8] sm:$0xff]
        %v410 = vld [vmem:[%s1 + $0xc0] sm:$0xff]
        %v411 = vld [vmem:[%s1 + $0xc8] sm:$0xff]
        %v412 = vld [vmem:[%s1 + $0xd0] sm:$0xff]
        %v413 = vld [vmem:[%s1 + $0xd8] sm:$0xff]
        %v414 = vld [vmem:[%s1 + $0xe0] sm:$0xff]
        %v415 = vld [vmem:[%s1 + $0xe8] sm:$0xff]
        %v416 = vld [vmem:[%s1 + $0xf0] sm:$0xff]
        %v417 = vld [vmem:[%s1 + $0xf8] sm:$0xff]
        %v418 = vld [vmem:[%s1 + $0x100] sm:$0xff]
        %v419 = vld [vmem:[%s1 + $0x108] sm:$0xff]
        %v420 = vld [vmem:[%s1 + $0x110] sm:$0xff]
        %v421 = vld [vmem:[%s1 + $0x118] sm:$0xff]
        %v422 = vld [vmem:[%s1 + $0x120] sm:$0xff]
        %v423 = vld [vmem:[%s1 + $0x128] sm:$0xff]
        %v424 = vld [vmem:[%s1 + $0x130] sm:$0xff]
        %v425 = vld [vmem:[%s1 + $0x138] sm:$0xff]
        %v426 = vld [vmem:[%s1 + $0x140] sm:$0xff]
        %v427 = vld [vmem:[%s1 + $0x148] sm:$0xff]
        %v428 = vld [vmem:[%s1 + $0x150] sm:$0xff]
        %v429 = vld [vmem:[%s1 + $0x158] sm:$0xff]
        %v430 = vld [vmem:[%s1 + $0x160] sm:$0xff]
        %v431 = vld [vmem:[%s1 + $0x168] sm:$0xff]
        %v432 = vld [vmem:[%s1 + $0x170] sm:$0xff]
        %v433 = vld [vmem:[%s1 + $0x178] sm:$0xff]
        %v434 = vld [vmem:[%s1 + $0x180] sm:$0xff]
        %v435 = vld [vmem:[%s1 + $0x188] sm:$0xff]
        %v436 = vld [vmem:[%s1 + $0x190] sm:$0xff]
        %v437 = vld [vmem:[%s1 + $0x198] sm:$0xff]
        %v438 = vld [vmem:[%s1 + $0x1a0] sm:$0xff]
        %v439 = vld [vmem:[%s1 + $0x1a8] sm:$0xff]
        %v440 = vld [vmem:[%s1 + $0x1b0] sm:$0xff]
        %v441 = vld [vmem:[%s1 + $0x1b8] sm:$0xff]
        %v442 = vld [vmem:[%s1 + $0x1c0] sm:$0xff]
        %v443 = vld [vmem:[%s1 + $0x1c8] sm:$0xff]
        %v444 = vld [vmem:[%s1 + $0x1d0] sm:$0xff]
        %v445 = vld [vmem:[%s1 + $0x1d8] sm:$0xff]
        %v446 = vld [vmem:[%s1 + $0x1e0] sm:$0xff]
        %v447 = vld [vmem:[%s1 + $0x1e8] sm:$0xff]
        %v448 = vld [vmem:[%s1 + $0x1f0] sm:$0xff]
        %v449 = vld [vmem:[%s1 + $0x1f8] sm:$0xff]
        %v451 = vcombine.high %v385, %v385
        %453 = vmatprep.subr.mxu0 %v417
        %454 = vmatpush1.msra.mxu0 %v416
        %455 = vmatprep.subr.mxu0 %v415
        %456 = vmatpush1.msra.mxu0 %v414
        %457 = vmatprep.subr.mxu0 %v413
        %458 = vmatpush1.msra.mxu0 %v412
        %459 = vmatprep.subr.mxu0 %v411
        %460 = vmatpush1.msra.mxu0 %v410
        %461 = vmatprep.subr.mxu0 %v409
        %462 = vmatpush1.msra.mxu0 %v408
        %463 = vmatprep.subr.mxu0 %v407
        %464 = vmatpush1.msra.mxu0 %v406
        %465 = vmatprep.subr.mxu0 %v405
        %466 = vmatpush1.msra.mxu0 %v404
        %467 = vmatprep.subr.mxu0 %v403
        %468 = vmatpush1.msra.mxu0 %v402
        %469 = vmatprep.subr.mxu0 %v401
        %470 = vmatpush1.msra.mxu0 %v400
        %471 = vmatprep.subr.mxu0 %v399
        %472 = vmatpush1.msra.mxu0 %v398
        %473 = vmatprep.subr.mxu0 %v397
        %474 = vmatpush1.msra.mxu0 %v396
        %475 = vmatprep.subr.mxu0 %v395
        %476 = vmatpush1.msra.mxu0 %v394
        %477 = vmatprep.subr.mxu0 %v393
        %478 = vmatpush1.msra.mxu0 %v392
        %479 = vmatprep.subr.mxu0 %v391
        %480 = vmatpush1.msra.mxu0 %v390
        %481 = vmatprep.subr.mxu0 %v389
        %482 = vmatpush1.msra.mxu0 %v388
        %483 = vmatprep.subr.mxu0 %v387
        %484 = vmatpush1.msra.mxu0 %v386
        %485 = vmatprep.subr.mxu0 %v449
        %486 = vmatpush2.msra.mxu0 %v448
        %487 = vmatprep.subr.mxu0 %v447
        %488 = vmatpush2.msra.mxu0 %v446
        %489 = vmatprep.subr.mxu0 %v445
        %490 = vmatpush2.msra.mxu0 %v444
        %491 = vmatprep.subr.mxu0 %v443
        %492 = vmatpush2.msra.mxu0 %v442
        %493 = vmatprep.subr.mxu0 %v441
        %494 = vmatpush2.msra.mxu0 %v440
        %495 = vmatprep.subr.mxu0 %v439
        %496 = vmatpush2.msra.mxu0 %v438
        %497 = vmatprep.subr.mxu0 %v437
        %498 = vmatpush2.msra.mxu0 %v436
        %499 = vmatprep.subr.mxu0 %v435
        %500 = vmatpush2.msra.mxu0 %v434
        %501 = vmatprep.subr.mxu0 %v433
        %502 = vmatpush2.msra.mxu0 %v432
        %503 = vmatprep.subr.mxu0 %v431
        %504 = vmatpush2.msra.mxu0 %v430
        %505 = vmatprep.subr.mxu0 %v429
        %506 = vmatpush2.msra.mxu0 %v428
        %507 = vmatprep.subr.mxu0 %v427
        %508 = vmatpush2.msra.mxu0 %v426
        %509 = vmatprep.subr.mxu0 %v425
        %510 = vmatpush2.msra.mxu0 %v424
        %511 = vmatprep.subr.mxu0 %v423
        %512 = vmatpush2.msra.mxu0 %v422
        %513 = vmatprep.subr.mxu0 %v421
        %514 = vmatpush2.msra.mxu0 %v420
        %515 = vmatprep.subr.mxu0 %v419
        %516 = vmatpush2.msra.mxu0 %v418
        %517 = vmatprep.mubr.f32.mxu0 %v451
        %518 = vmatmul.mubr.f32.gmra.mxu0 %v385
        %v519 = vpop.f32.mrf.mxu0
        %v520 = vadd.f32 0.0, %v519
        %v521 = vpop.f32.mrf.mxu0
        %v522 = vadd.f32 0.0, %v521
        %523 = vdwg.mxu0
        %v524 = vld [vmem:[%s5] sm:$0xff]
        %vm525 = vcmask 31744
        %v527 = vsel %vm525, %v524, 0
        %vm529 = vcmask 1043456
        %v531 = vsel %vm529, %v520, 0
        %v534 = vsel %vm529, %v522, 0
        %536 = vmatprep.subr.mxu0 0.0
        %537 = vmatpush1.msra.mxu0 0.0
        %538 = vmatprep.subr.mxu0 0.0
        %539 = vmatpush1.msra.mxu0 0.0
        %540 = vmatprep.subr.mxu0 0.0
        %541 = vmatpush1.msra.mxu0 0.0
        %542 = vmatprep.subr.mxu0 0.0
        %543 = vmatpush1.msra.mxu0 0.0
        %544 = vmatprep.subr.mxu0 0.0
        %545 = vmatpush1.msra.mxu0 0.0
        %546 = vmatprep.subr.mxu0 0.0
        %547 = vmatpush1.msra.mxu0 0.0
        %548 = vmatprep.subr.mxu0 0.0
        %549 = vmatpush1.msra.mxu0 0.0
        %550 = vmatprep.subr.mxu0 0.0
        %551 = vmatpush1.msra.mxu0 0.0
        %552 = vmatprep.subr.mxu0 0.0
        %553 = vmatpush1.msra.mxu0 0.0
        %554 = vmatprep.subr.mxu0 0.0
        %555 = vmatpush1.msra.mxu0 0.0
        %556 = vmatprep.subr.mxu0 0.0
        %557 = vmatpush1.msra.mxu0 0.0
        %558 = vmatprep.subr.mxu0 0.0
        %559 = vmatpush1.msra.mxu0 0.0
        %560 = vmatprep.subr.mxu0 0.0
        %561 = vmatpush1.msra.mxu0 0.0
        %562 = vmatprep.subr.mxu0 0.0
        %563 = vmatpush1.msra.mxu0 0.0
        %564 = vmatprep.subr.mxu0 0.0
        %565 = vmatpush1.msra.mxu0 0.0
        %566 = vmatprep.subr.mxu0 %v534
        %567 = vmatpush1.msra.mxu0 %v531
        %568 = vmatprep.subr.mxu0 0.0
        %569 = vmatpush2.msra.mxu0 0.0
        %570 = vmatprep.subr.mxu0 0.0
        %571 = vmatpush2.msra.mxu0 0.0
        %572 = vmatprep.subr.mxu0 0.0
        %573 = vmatpush2.msra.mxu0 0.0
        %574 = vmatprep.subr.mxu0 0.0
        %575 = vmatpush2.msra.mxu0 0.0
        %576 = vmatprep.subr.mxu0 0.0
        %577 = vmatpush2.msra.mxu0 0.0
        %578 = vmatprep.subr.mxu0 0.0
        %579 = vmatpush2.msra.mxu0 0.0
        %580 = vmatprep.subr.mxu0 0.0
        %581 = vmatpush2.msra.mxu0 0.0
        %582 = vmatprep.subr.mxu0 0.0
        %583 = vmatpush2.msra.mxu0 0.0
        %584 = vmatprep.subr.mxu0 0.0
        %585 = vmatpush2.msra.mxu0 0.0
        %586 = vmatprep.subr.mxu0 0.0
        %587 = vmatpush2.msra.mxu0 0.0
        %588 = vmatprep.subr.mxu0 0.0
        %589 = vmatpush2.msra.mxu0 0.0
        %590 = vmatprep.subr.mxu0 0.0
        %591 = vmatpush2.msra.mxu0 0.0
        %592 = vmatprep.subr.mxu0 0.0
        %593 = vmatpush2.msra.mxu0 0.0
        %594 = vmatprep.subr.mxu0 0.0
        %595 = vmatpush2.msra.mxu0 0.0
        %596 = vmatprep.subr.mxu0 0.0
        %597 = vmatpush2.msra.mxu0 0.0
        %598 = vmatprep.subr.mxu0 0.0
        %599 = vmatpush2.msra.mxu0 0.0
        %600 = vmatprep.mubr.f32.mxu0 0.0
        %601 = vmatmul.mubr.f32.gmra.mxu0 %v527
        %v602 = vpop.f32.mrf.mxu0
        %v603 = vadd.f32 0.0, %v602
        %v604 = vpop.f32.mrf.mxu0
        %v605 = vadd.f32 0.0, %v604
        %606 = vdwg.mxu0
        %v607 = vld [vmem:[%s2] sm:$0x3]
        %v609 = vlaneseq
        %v610 = vshrl.u32 %v609, 7
        %v611 = vsub.s32 0, %v610
        %v612 = vrot.slane %v607, %v611
        %v613 = vlaneseq
        %v614 = vshrl.u32 %v613, 7
        %v615 = vsub.s32 1, %v614
        %v616 = vrot.slane %v607, %v615
        %v619 = vmul.f32 %v603, %v612
        %v620 = vmul.f32 %v605, %v616
        %v621 = vld [vmem:[%s6] sm:$0xff]
        %623 = vset.pattern.permute.xlu0 0
        %624 = vperm.xlu0 %623, %v621
        %v625 = vpop.permute.xlu0 %624
        %v627 = vadd.f32 %v619, %v625
        %v628 = vadd.f32 %v620, %v625
        %v629 = vadd.f32 %v627, 3.0
        %v630 = vadd.f32 %v628, 3.0
        %v631 = vmax.f32 %v629, 0.0
        %v632 = vmax.f32 %v630, 0.0
        %v633 = vmin.f32 %v631, 6.0
        %v634 = vmin.f32 %v632, 6.0
        %v635 = vmul.f32 %v627, %v633
        %v636 = vmul.f32 %v628, %v634
        %v637 = vmul.f32 %v635, 0.16666667
        %v638 = vmul.f32 %v636, 0.16666667
        %v639 = vld [vmem:[%s7] sm:$0xf]
        %v640 = vld [vmem:[%s8] sm:$0xf]
        %642 = vset.pattern.permute.xlu0 0
        %643 = vperm.xlu0 %642, %v640
        %v644 = vpop.permute.xlu0 %643
        %vm646 = vcmask 64512
        %v648 = vsel %vm646, %v639, 0
        %650 = vmatprep.subr.mxu0 0.0
        %651 = vmatpush1.msra.mxu0 0.0
        %652 = vmatprep.subr.mxu0 0.0
        %653 = vmatpush1.msra.mxu0 0.0
        %654 = vmatprep.subr.mxu0 0.0
        %655 = vmatpush1.msra.mxu0 0.0
        %656 = vmatprep.subr.mxu0 0.0
        %657 = vmatpush1.msra.mxu0 0.0
        %658 = vmatprep.subr.mxu0 0.0
        %659 = vmatpush1.msra.mxu0 0.0
        %660 = vmatprep.subr.mxu0 0.0
        %661 = vmatpush1.msra.mxu0 0.0
        %662 = vmatprep.subr.mxu0 0.0
        %663 = vmatpush1.msra.mxu0 0.0
        %664 = vmatprep.subr.mxu0 0.0
        %665 = vmatpush1.msra.mxu0 0.0
        %666 = vmatprep.subr.mxu0 0.0
        %667 = vmatpush1.msra.mxu0 0.0
        %668 = vmatprep.subr.mxu0 0.0
        %669 = vmatpush1.msra.mxu0 0.0
        %670 = vmatprep.subr.mxu0 0.0
        %671 = vmatpush1.msra.mxu0 0.0
        %672 = vmatprep.subr.mxu0 0.0
        %673 = vmatpush1.msra.mxu0 0.0
        %674 = vmatprep.subr.mxu0 0.0
        %675 = vmatpush1.msra.mxu0 0.0
        %676 = vmatprep.subr.mxu0 0.0
        %677 = vmatpush1.msra.mxu0 0.0
        %678 = vmatprep.subr.mxu0 0.0
        %679 = vmatpush1.msra.mxu0 0.0
        %680 = vmatprep.subr.mxu0 0.0
        %681 = vmatpush1.msra.mxu0 %v637
        %682 = vmatprep.subr.mxu0 0.0
        %683 = vmatpush2.msra.mxu0 0.0
        %684 = vmatprep.subr.mxu0 0.0
        %685 = vmatpush2.msra.mxu0 0.0
        %686 = vmatprep.subr.mxu0 0.0
        %687 = vmatpush2.msra.mxu0 0.0
        %688 = vmatprep.subr.mxu0 0.0
        %689 = vmatpush2.msra.mxu0 0.0
        %690 = vmatprep.subr.mxu0 0.0
        %691 = vmatpush2.msra.mxu0 0.0
        %692 = vmatprep.subr.mxu0 0.0
        %693 = vmatpush2.msra.mxu0 0.0
        %694 = vmatprep.subr.mxu0 0.0
        %695 = vmatpush2.msra.mxu0 0.0
        %696 = vmatprep.subr.mxu0 0.0
        %697 = vmatpush2.msra.mxu0 0.0
        %698 = vmatprep.subr.mxu0 0.0
        %699 = vmatpush2.msra.mxu0 0.0
        %700 = vmatprep.subr.mxu0 0.0
        %701 = vmatpush2.msra.mxu0 0.0
        %702 = vmatprep.subr.mxu0 0.0
        %703 = vmatpush2.msra.mxu0 0.0
        %704 = vmatprep.subr.mxu0 0.0
        %705 = vmatpush2.msra.mxu0 0.0
        %706 = vmatprep.subr.mxu0 0.0
        %707 = vmatpush2.msra.mxu0 0.0
        %708 = vmatprep.subr.mxu0 0.0
        %709 = vmatpush2.msra.mxu0 0.0
        %710 = vmatprep.subr.mxu0 0.0
        %711 = vmatpush2.msra.mxu0 0.0
        %712 = vmatprep.subr.mxu0 0.0
        %713 = vmatpush2.msra.mxu0 0.0
        %714 = vmatprep.mubr.f32.mxu0 0.0
        %715 = vmatmul.mubr.f32.gmra.mxu0 %v648
        %v716 = vpop.f32.mrf.mxu0
        %v717 = vadd.f32 %v644, %v716
        %v718 = vpop.f32.mrf.mxu0
        %719 = vdwg.mxu0
        %v720 = vxor.u32 %v717, 2147483648
        %v721 = vmul.f32 %v720, 1.442695
        %v722 = vpow.pop %v721
        %v723 = vadd.f32 %v722, 1.0
        %v724 = vrcp.pop %v723
        %v725 = vmul.f32 1.0, %v724
        %v726 = vld [vmem:[%s9] sm:$0xf]
        %v727 = vld [vmem:[%s10] sm:$0xf]
        %729 = vset.pattern.permute.xlu0 0
        %730 = vperm.xlu0 %729, %v727
        %v731 = vpop.permute.xlu0 %730
        %v734 = vsel %vm646, %v726, 0
        %736 = vmatprep.subr.mxu0 0.0
        %737 = vmatpush1.msra.mxu0 0.0
        %738 = vmatprep.subr.mxu0 0.0
        %739 = vmatpush1.msra.mxu0 0.0
        %740 = vmatprep.subr.mxu0 0.0
        %741 = vmatpush1.msra.mxu0 0.0
        %742 = vmatprep.subr.mxu0 0.0
        %743 = vmatpush1.msra.mxu0 0.0
        %744 = vmatprep.subr.mxu0 0.0
        %745 = vmatpush1.msra.mxu0 0.0
        %746 = vmatprep.subr.mxu0 0.0
        %747 = vmatpush1.msra.mxu0 0.0
        %748 = vmatprep.subr.mxu0 0.0
        %749 = vmatpush1.msra.mxu0 0.0
        %750 = vmatprep.subr.mxu0 0.0
        %751 = vmatpush1.msra.mxu0 0.0
        %752 = vmatprep.subr.mxu0 0.0
        %753 = vmatpush1.msra.mxu0 0.0
        %754 = vmatprep.subr.mxu0 0.0
        %755 = vmatpush1.msra.mxu0 0.0
        %756 = vmatprep.subr.mxu0 0.0
        %757 = vmatpush1.msra.mxu0 0.0
        %758 = vmatprep.subr.mxu0 0.0
        %759 = vmatpush1.msra.mxu0 0.0
        %760 = vmatprep.subr.mxu0 0.0
        %761 = vmatpush1.msra.mxu0 0.0
        %762 = vmatprep.subr.mxu0 0.0
        %763 = vmatpush1.msra.mxu0 0.0
        %764 = vmatprep.subr.mxu0 0.0
        %765 = vmatpush1.msra.mxu0 0.0
        %766 = vmatprep.subr.mxu0 0.0
        %767 = vmatpush1.msra.mxu0 %v638
        %768 = vmatprep.subr.mxu0 0.0
        %769 = vmatpush2.msra.mxu0 0.0
        %770 = vmatprep.subr.mxu0 0.0
        %771 = vmatpush2.msra.mxu0 0.0
        %772 = vmatprep.subr.mxu0 0.0
        %773 = vmatpush2.msra.mxu0 0.0
        %774 = vmatprep.subr.mxu0 0.0
        %775 = vmatpush2.msra.mxu0 0.0
        %776 = vmatprep.subr.mxu0 0.0
        %777 = vmatpush2.msra.mxu0 0.0
        %778 = vmatprep.subr.mxu0 0.0
        %779 = vmatpush2.msra.mxu0 0.0
        %780 = vmatprep.subr.mxu0 0.0
        %781 = vmatpush2.msra.mxu0 0.0
        %782 = vmatprep.subr.mxu0 0.0
        %783 = vmatpush2.msra.mxu0 0.0
        %784 = vmatprep.subr.mxu0 0.0
        %785 = vmatpush2.msra.mxu0 0.0
        %786 = vmatprep.subr.mxu0 0.0
        %787 = vmatpush2.msra.mxu0 0.0
        %788 = vmatprep.subr.mxu0 0.0
        %789 = vmatpush2.msra.mxu0 0.0
        %790 = vmatprep.subr.mxu0 0.0
        %791 = vmatpush2.msra.mxu0 0.0
        %792 = vmatprep.subr.mxu0 0.0
        %793 = vmatpush2.msra.mxu0 0.0
        %794 = vmatprep.subr.mxu0 0.0
        %795 = vmatpush2.msra.mxu0 0.0
        %796 = vmatprep.subr.mxu0 0.0
        %797 = vmatpush2.msra.mxu0 0.0
        %798 = vmatprep.subr.mxu0 0.0
        %799 = vmatpush2.msra.mxu0 0.0
        %800 = vmatprep.mubr.f32.mxu0 0.0
        %801 = vmatmul.mubr.f32.gmra.mxu0 %v734
        %v802 = vpop.f32.mrf.mxu0
        %v803 = vadd.f32 %v731, %v802
        %v804 = vpop.f32.mrf.mxu0
        %805 = vdwg.mxu0
        %v806 = vxor.u32 %v803, 2147483648
        %v807 = vmul.f32 %v806, 1.442695
        %v808 = vpow.pop %v807
        %v809 = vadd.f32 %v808, 1.0
        %v810 = vrcp.pop %v809
        %v811 = vmul.f32 1.0, %v810
        %v812 = vld [vmem:[%s3] sm:$0xff]
        %v813 = vld [vmem:[%s3 + $0x8] sm:$0xff]
        %v814 = vld [vmem:[%s3 + $0x10] sm:$0xff]
        %v815 = vld [vmem:[%s3 + $0x18] sm:$0xff]
        %vm816 = vcmask 130048
        %v818 = vsel %vm816, %v725, 0
        %820 = vmatprep.subr.mxu0 0.0
        %821 = vmatpush1.msra.mxu0 0.0
        %822 = vmatprep.subr.mxu0 0.0
        %823 = vmatpush1.msra.mxu0 0.0
        %824 = vmatprep.subr.mxu0 0.0
        %825 = vmatpush1.msra.mxu0 0.0
        %826 = vmatprep.subr.mxu0 0.0
        %827 = vmatpush1.msra.mxu0 0.0
        %828 = vmatprep.subr.mxu0 0.0
        %829 = vmatpush1.msra.mxu0 0.0
        %830 = vmatprep.subr.mxu0 0.0
        %831 = vmatpush1.msra.mxu0 0.0
        %832 = vmatprep.subr.mxu0 0.0
        %833 = vmatpush1.msra.mxu0 0.0
        %834 = vmatprep.subr.mxu0 0.0
        %835 = vmatpush1.msra.mxu0 0.0
        %836 = vmatprep.subr.mxu0 0.0
        %837 = vmatpush1.msra.mxu0 0.0
        %838 = vmatprep.subr.mxu0 0.0
        %839 = vmatpush1.msra.mxu0 0.0
        %840 = vmatprep.subr.mxu0 0.0
        %841 = vmatpush1.msra.mxu0 0.0
        %842 = vmatprep.subr.mxu0 0.0
        %843 = vmatpush1.msra.mxu0 0.0
        %844 = vmatprep.subr.mxu0 0.0
        %845 = vmatpush1.msra.mxu0 0.0
        %846 = vmatprep.subr.mxu0 0.0
        %847 = vmatpush1.msra.mxu0 0.0
        %848 = vmatprep.subr.mxu0 %v815
        %849 = vmatpush1.msra.mxu0 %v814
        %850 = vmatprep.subr.mxu0 %v813
        %851 = vmatpush1.msra.mxu0 %v812
        %852 = vmatprep.subr.mxu0 0.0
        %853 = vmatpush2.msra.mxu0 0.0
        %854 = vmatprep.subr.mxu0 0.0
        %855 = vmatpush2.msra.mxu0 0.0
        %856 = vmatprep.subr.mxu0 0.0
        %857 = vmatpush2.msra.mxu0 0.0
        %858 = vmatprep.subr.mxu0 0.0
        %859 = vmatpush2.msra.mxu0 0.0
        %860 = vmatprep.subr.mxu0 0.0
        %861 = vmatpush2.msra.mxu0 0.0
        %862 = vmatprep.subr.mxu0 0.0
        %863 = vmatpush2.msra.mxu0 0.0
        %864 = vmatprep.subr.mxu0 0.0
        %865 = vmatpush2.msra.mxu0 0.0
        %866 = vmatprep.subr.mxu0 0.0
        %867 = vmatpush2.msra.mxu0 0.0
        %868 = vmatprep.subr.mxu0 0.0
        %869 = vmatpush2.msra.mxu0 0.0
        %870 = vmatprep.subr.mxu0 0.0
        %871 = vmatpush2.msra.mxu0 0.0
        %872 = vmatprep.subr.mxu0 0.0
        %873 = vmatpush2.msra.mxu0 0.0
        %874 = vmatprep.subr.mxu0 0.0
        %875 = vmatpush2.msra.mxu0 0.0
        %876 = vmatprep.subr.mxu0 0.0
        %877 = vmatpush2.msra.mxu0 0.0
        %878 = vmatprep.subr.mxu0 0.0
        %879 = vmatpush2.msra.mxu0 0.0
        %880 = vmatprep.subr.mxu0 0.0
        %881 = vmatpush2.msra.mxu0 0.0
        %882 = vmatprep.subr.mxu0 0.0
        %883 = vmatpush2.msra.mxu0 0.0
        %884 = vmatprep.mubr.f32.mxu0 0.0
        %885 = vmatmul.mubr.f32.gmra.mxu0 %v818
        %v886 = vpop.f32.mrf.mxu0
        %v887 = vadd.f32 0.0, %v886
        %v888 = vpop.f32.mrf.mxu0
        %v889 = vadd.f32 0.0, %v888
        %890 = vdwg.mxu0
        %v891 = vld [vmem:[%s4] sm:$0xff]
        %v892 = vld [vmem:[%s4 + $0x8] sm:$0xff]
        %v893 = vld [vmem:[%s4 + $0x10] sm:$0xff]
        %v894 = vld [vmem:[%s4 + $0x18] sm:$0xff]
        %v896 = vsel %vm816, %v811, 0
        %898 = vmatprep.subr.mxu0 0.0
        %899 = vmatpush1.msra.mxu0 0.0
        %900 = vmatprep.subr.mxu0 0.0
        %901 = vmatpush1.msra.mxu0 0.0
        %902 = vmatprep.subr.mxu0 0.0
        %903 = vmatpush1.msra.mxu0 0.0
        %904 = vmatprep.subr.mxu0 0.0
        %905 = vmatpush1.msra.mxu0 0.0
        %906 = vmatprep.subr.mxu0 0.0
        %907 = vmatpush1.msra.mxu0 0.0
        %908 = vmatprep.subr.mxu0 0.0
        %909 = vmatpush1.msra.mxu0 0.0
        %910 = vmatprep.subr.mxu0 0.0
        %911 = vmatpush1.msra.mxu0 0.0
        %912 = vmatprep.subr.mxu0 0.0
        %913 = vmatpush1.msra.mxu0 0.0
        %914 = vmatprep.subr.mxu0 0.0
        %915 = vmatpush1.msra.mxu0 0.0
        %916 = vmatprep.subr.mxu0 0.0
        %917 = vmatpush1.msra.mxu0 0.0
        %918 = vmatprep.subr.mxu0 0.0
        %919 = vmatpush1.msra.mxu0 0.0
        %920 = vmatprep.subr.mxu0 0.0
        %921 = vmatpush1.msra.mxu0 0.0
        %922 = vmatprep.subr.mxu0 0.0
        %923 = vmatpush1.msra.mxu0 0.0
        %924 = vmatprep.subr.mxu0 0.0
        %925 = vmatpush1.msra.mxu0 0.0
        %926 = vmatprep.subr.mxu0 %v894
        %927 = vmatpush1.msra.mxu0 %v893
        %928 = vmatprep.subr.mxu0 %v892
        %929 = vmatpush1.msra.mxu0 %v891
        %930 = vmatprep.subr.mxu0 0.0
        %931 = vmatpush2.msra.mxu0 0.0
        %932 = vmatprep.subr.mxu0 0.0
        %933 = vmatpush2.msra.mxu0 0.0
        %934 = vmatprep.subr.mxu0 0.0
        %935 = vmatpush2.msra.mxu0 0.0
        %936 = vmatprep.subr.mxu0 0.0
        %937 = vmatpush2.msra.mxu0 0.0
        %938 = vmatprep.subr.mxu0 0.0
        %939 = vmatpush2.msra.mxu0 0.0
        %940 = vmatprep.subr.mxu0 0.0
        %941 = vmatpush2.msra.mxu0 0.0
        %942 = vmatprep.subr.mxu0 0.0
        %943 = vmatpush2.msra.mxu0 0.0
        %944 = vmatprep.subr.mxu0 0.0
        %945 = vmatpush2.msra.mxu0 0.0
        %946 = vmatprep.subr.mxu0 0.0
        %947 = vmatpush2.msra.mxu0 0.0
        %948 = vmatprep.subr.mxu0 0.0
        %949 = vmatpush2.msra.mxu0 0.0
        %950 = vmatprep.subr.mxu0 0.0
        %951 = vmatpush2.msra.mxu0 0.0
        %952 = vmatprep.subr.mxu0 0.0
        %953 = vmatpush2.msra.mxu0 0.0
        %954 = vmatprep.subr.mxu0 0.0
        %955 = vmatpush2.msra.mxu0 0.0
        %956 = vmatprep.subr.mxu0 0.0
        %957 = vmatpush2.msra.mxu0 0.0
        %958 = vmatprep.subr.mxu0 0.0
        %959 = vmatpush2.msra.mxu0 0.0
        %960 = vmatprep.subr.mxu0 0.0
        %961 = vmatpush2.msra.mxu0 0.0
        %962 = vmatprep.mubr.f32.mxu0 0.0
        %963 = vmatmul.mubr.f32.gmra.mxu0 %v896
        %v964 = vpop.f32.mrf.mxu0
        %v965 = vadd.f32 0.0, %v964
        %v966 = vpop.f32.mrf.mxu0
        %v967 = vadd.f32 0.0, %v966
        %968 = vdwg.mxu0
        %v969 = vmul.f32 %v887, %v965
        %v970 = vmul.f32 %v889, %v967
        %v973 = vcombine.low %v969, %v970
        %v975 = vmul.f32 %v385, %v973
        %976 = vst [vmem:[%s379] sm:$0xff] %v975
        %s977 = sand.u32 %s269, 1
        %s978 = scalar_lea.sflag [#allocation3], %s977
        %s979 = sand.u32 %s269, 1
        %s980 = smul.addr %s979, 8
        %s981 = scalar_lea.vmem [#allocation2], %s980
        // Predicated region
        $region65: #{tpu_custom_call.1} parent=63 // pred_check
          %p982 = pneg %p279
        $region66: #{tpu_custom_call.1} parent=63 // pred_check_branch
          %984 = sbr.rel (%p982) target = $region68
        $region67: #{tpu_custom_call.1} parent=63 // pred_region
          %s986 = ssub.s32 128, 128
          %987 = vsyncadd %s978, %s986
          %s988 = smul.addr %s25, 2
          %s989 = smul.addr %s988, 64
          %s990 = scalar_lea.hbm %s11, %s989
          %s992 = sshll.u32 %s981, 4
          %s993 = int_to_ptr.vmem [resolvable:$true] %s992
          %995 = dma.vmem_to_hbm [thread:$0]  %s993, 128, %s990, %s978
        $region68: #{tpu_custom_call.1} parent=63 // pred_fallthru
          _
      $region64: #{tpu_custom_call.1} parent=5 // pred_fallthru
        _
      %p996 = scmp.le.s32.totalorder 2, %s20
      // Predicated region
      $region69: #{tpu_custom_call.1} parent=5 // pred_check
        %p997 = pneg %p996
      $region70: #{tpu_custom_call.1} parent=5 // pred_check_branch
        %999 = sbr.rel (%p997) target = $region72
      $region71: #{tpu_custom_call.1} parent=5 // pred_region
        %s1000 = ssub.s32 %s20, 2
        // Predicated region
        $region73: #{tpu_custom_call.1} parent=71 // pred_check
          %p1001 = pneg %p285
        $region74: #{tpu_custom_call.1} parent=71 // pred_check_branch
          %1003 = sbr.rel (%p1001) target = $region76
        $region75: #{tpu_custom_call.1} parent=71 // pred_region
          %s1004 = sand.u32 %s270, 1
          %s1005 = scalar_lea.sflag [#allocation3], %s1004
          %s1006 = sand.u32 %s270, 1
          %s1007 = smul.addr %s1006, 8
          %s1008 = scalar_lea.vmem [#allocation2], %s1007
          %1009 = dma.done %s1005, 128
        $region76: #{tpu_custom_call.1} parent=71 // pred_fallthru
          _
      $region72: #{tpu_custom_call.1} parent=5 // pred_fallthru
        _
    $region6: #{tpu_custom_call.1} parent=1 // loop_footer
      %s24 = sadd.s32 1, %s20
    $region7: #{tpu_custom_call.1} parent=1 // loop_footer_branch
      %19 = sbr.rel target = $region3
    $region8: #{tpu_custom_call.1} parent=1 // loop_exit
      _
    %1010 = vsyncpa [#allocation3], 1
    %s1011 = scalar_lea.sflag [#allocation3], 1
    %1012 = vsyncpa %s1011, 1

</llo_original>
